<compile_context>
chip_gen: v5e
topology: v5e:2x2
jax: 0.10.0
libtpu: 0.0.40
codegen_flags: <defaults>
</compile_context>

<pallas_src>
import math
import functools

import jax
import jax.numpy as jnp
from jax.experimental import pallas as pl
from jax.experimental.pallas import tpu as pltpu

LN_EPS = 1e-5
SEQ_IDX = 4          # the reference module hard-codes x_inter_res[:, :, 4, :]

# Weight-slab rows ([10, D, D], layout [in, out] == torch weight.T)
(W_IQ, W_IK, W_IV, W_IO,           # InterAttention q/k/v/out projections
 W_AQ, W_AK, W_AV, W_AO,           # IntraAttention q/k/v/out projections
 W_F1, W_F2) = range(10)           # FeedForward linear1 / linear2

# Vector-slab rows ([16, D])
(V_ILN_G, V_ILN_B, V_IBQ, V_IBK, V_IBV, V_IBO,
 V_ABQ, V_ABK, V_ABV, V_ABO,
 V_FLN_G, V_FLN_B, V_FB1, V_FB2,
 V_OLN_G, V_OLN_B) = range(16)


# ----------------------------------------------------------------------------
# In-kernel math helpers (all f32 elementwise work; bf16 only at MXU operands)
# ----------------------------------------------------------------------------
def _layernorm(x, g, b):
    mu = jnp.mean(x, axis=-1, keepdims=True)
    var = jnp.mean(jnp.square(x - mu), axis=-1, keepdims=True)
    return (x - mu) * jax.lax.rsqrt(var + LN_EPS) * g + b


def _gelu_tanh(x):
    # tanh-approx GELU (EUP tanh).  Matches torch.nn.GELU (exact erf) to ~1e-3.
    # TODO(synk): switch to the exact erf formulation if bit-level parity with
    # torch's default GELU is required.
    c = 0.7978845608028654  # sqrt(2/pi)
    return 0.5 * x * (1.0 + jnp.tanh(c * (x + 0.044715 * x * x * x)))


def _mh_attend(prod, v, hmask, scale):
    """Multi-head softmax attention without per-head loops or narrow matmuls.

    prod  : [A, K, D] elementwise q*k products for every (query, key) pair.
    v     : [A, K, D] values.
    hmask : [D, D] block-diagonal head mask (1 where both lanes belong to the
            same head).  prod @ hmask simultaneously (a) reduces q*k over each
            head's dh lanes and (b) broadcasts the per-head score back to all
            of that head's lanes, so the softmax below is per-head even though
            it runs on full D-lane rows.  A single N=K=D MXU matmul replaces
            the previous [D,H] + [H,D] pair (N=4 on a 256-wide MXU).
    """
    a, k, d = prod.shape
    sc = jnp.dot(prod.reshape(a * k, d), hmask,
                 preferred_element_type=jnp.float32).reshape(a, k, d) * scale
    m = jnp.max(sc, axis=1, keepdims=True)
    p = jnp.exp(sc - m)
    p = p / jnp.sum(p, axis=1, keepdims=True)      # exact softmax (torch parity)
    # PV contraction over K on the XLU; fine at K <= 8.
    # TODO(synk): for large S route this through [A,K]@[K,dh] MXU matmuls.
    return jnp.sum(p * v, axis=1)                  # [A, D]


# ----------------------------------------------------------------------------
# One fused kernel: inter-MHA(row 4) + residual + intra-MHA + residual +
#                   FFN + residual + final LayerNorm, for Bt batch elements.
# ----------------------------------------------------------------------------
def _fused_transformer_kernel(x_ref, w_ref, vec_ref, hmask_ref, o_ref,
                              *, num_heads):
    f32, bf16 = jnp.float32, jnp.bfloat16
    bt, e, s, d = x_ref.shape
    dh = d // num_heads
    scale = 1.0 / math.sqrt(dh)
    n_all, n_row = bt * e * s, bt * e

    x = x_ref[...].astype(f32)                     # [Bt, E, S, D]
    vec = vec_ref[...]                             # [16, D] f32  (resident)
    hmask = hmask_ref[...]                         # [D, D]  f32  (resident)

    def vrow(i):                                   # [1, D] parameter row
        return vec[i:i + 1, :]

    # ---- InterAttention: LN -> MHA over S; only query row SEQ_IDX consumed --
    xn = _layernorm(x, vrow(V_ILN_G), vrow(V_ILN_B))                   # [Bt,E,S,D]
    xn_flat = xn.reshape(n_all, d).astype(bf16)
    k = jnp.dot(xn_flat, w_ref[W_IK], preferred_element_type=f32) + vrow(V_IBK)
    v = jnp.dot(xn_flat, w_ref[W_IV], preferred_element_type=f32) + vrow(V_IBV)
    k = k.reshape(n_row, s, d)
    v = v.reshape(n_row, s, d)
    # Q only for the consumed query position: saves (S-1)/S of the Q matmul.
    xn4 = xn[:, :, SEQ_IDX, :].reshape(n_row, d).astype(bf16)
    q4 = jnp.dot(xn4, w_ref[W_IQ], preferred_element_type=f32) + vrow(V_IBQ)
    ctx = _mh_attend(q4[:, None, :] * k, v, hmask, scale)              # [N_row,D]
    attn4 = jnp.dot(ctx.astype(bf16), w_ref[W_IO],
                    preferred_element_type=f32) + vrow(V_IBO)
    inter4 = attn4 + x[:, :, SEQ_IDX, :].reshape(n_row, d)   # residual w/ ORIGINAL x

    # ---- IntraAttention over the E axis (no LayerNorm in the reference) ----
    inter4_b = inter4.astype(bf16)
    q2 = jnp.dot(inter4_b, w_ref[W_AQ], preferred_element_type=f32) + vrow(V_ABQ)
    k2 = jnp.dot(inter4_b, w_ref[W_AK], preferred_element_type=f32) + vrow(V_ABK)
    v2 = jnp.dot(inter4_b, w_ref[W_AV], preferred_element_type=f32) + vrow(V_ABV)
    q2 = q2.reshape(bt, e, d)
    k2 = k2.reshape(bt, e, d)
    v2 = v2.reshape(bt, e, d)
    prod2 = (q2[:, :, None, :] * k2[:, None, :, :]).reshape(n_row, e, d)
    v2b = jnp.broadcast_to(v2[:, None, :, :], (bt, e, e, d)).reshape(n_row, e, d)
    ctx2 = _mh_attend(prod2, v2b, hmask, scale)                        # [N_row,D]
    attn2 = jnp.dot(ctx2.astype(bf16), w_ref[W_AO],
                    preferred_element_type=f32) + vrow(V_ABO)
    intra = attn2 + inter4

    # ---- FeedForward (LN -> Linear -> GELU -> Linear) + residual -----------
    hn = _layernorm(intra, vrow(V_FLN_G), vrow(V_FLN_B))
    h1 = jnp.dot(hn.astype(bf16), w_ref[W_F1],
                 preferred_element_type=f32) + vrow(V_FB1)
    h1 = _gelu_tanh(h1)
    ff = jnp.dot(h1.astype(bf16), w_ref[W_F2],
                 preferred_element_type=f32) + vrow(V_FB2)
    z = ff + intra

    # ---- final Transformer.norm + lane-dense (128-lane) store --------------
    out = _layernorm(z, vrow(V_OLN_G), vrow(V_OLN_B))                  # [N_row,D]
    o_ref[...] = out.reshape(bt, e, d).astype(o_ref.dtype)


# ----------------------------------------------------------------------------
# Wrapper
# ----------------------------------------------------------------------------
def _resident_spec(shape):
    # Full-array block with a constant block index: stays VMEM-resident across
    # the (parallel) batch grid — no per-step re-DMA.
    return pl.BlockSpec(shape, lambda i: (0,) * len(shape))


def _pick_batch_block(batch, target=8):
    """Largest divisor of `batch` that is <= target while keeping >= 2 grid
    steps (so both v7x TensorCores get work whenever batch >= 2)."""
    if batch <= 1:
        return 1
    cap = max(1, min(target, batch // 2))
    for bt in range(cap, 0, -1):
        if batch % bt == 0:
            return bt
    return 1


def _head_mask(dim, num_heads):
    dh = dim // num_heads
    i = jnp.arange(dim)
    return (i[:, None] // dh == i[None, :] // dh).astype(jnp.float32)


def transformer_forward(x, layers, final_ln, num_heads, *, batch_block=None):
    """Mirrors Transformer.forward.  `x` is never fed forward between layers
    and only the last layer's x_final reaches the output norm, so layers
    0..L-2 are dead code; executing only the last layer gives the same output.
    Returns [B, E, D]."""
    assert len(layers) >= 1
    b_sz, e, s, d = x.shape
    assert s > SEQ_IDX, "module indexes sequence position 4"
    assert d % num_heads == 0
    p = layers[-1]

    bt = batch_block if batch_block is not None else _pick_batch_block(b_sz)
    assert b_sz % bt == 0
    grid = (b_sz // bt,)

    hmask = _head_mask(d, num_heads)                               # [D, D] f32
    vecs = jnp.concatenate([p["vslab"], final_ln["gb"]], axis=0)   # [16, D] f32

    kernel = functools.partial(_fused_transformer_kernel, num_heads=num_heads)
    return pl.pallas_call(
        kernel,
        out_shape=jax.ShapeDtypeStruct((b_sz, e, d), x.dtype),
        grid=grid,
        in_specs=[
            pl.BlockSpec((bt, e, s, d), lambda i: (i, 0, 0, 0)),   # x (batch block)
            _resident_spec(p["wslab"].shape),                      # [10, D, D] bf16
            _resident_spec(vecs.shape),                            # [16, D]    f32
            _resident_spec(hmask.shape),                           # [D, D]     f32
        ],
        out_specs=pl.BlockSpec((bt, e, d), lambda i: (i, 0, 0)),
        compiler_params=pltpu.CompilerParams(
            dimension_semantics=("parallel",)),      # both TCs busy on v7x
        # TODO(synk): for large D (>= 1024) set vmem_limit_bytes and use
        # pipeline_mode=pl.Buffered(1) on the resident weight specs (v7x has
        # only 64 MiB of physical VMEM); irrelevant at this scale.
    )(x, p["wslab"], vecs, hmask)


# ----------------------------------------------------------------------------
# Parameter init (deterministic, synthetic), stored directly in the packed
# kernel-friendly layout:
#   wslab: [10, D, D] bf16, each slice pre-transposed to [in, out]
#   vslab: [14, D]    f32  (per-layer LN params and bias rows)
#   final: {"gb": [2, D]}  f32  (Transformer.norm gamma / beta)
# ----------------------------------------------------------------------------
def init_params(key, dim, num_layers):
    def nrm(k, shape):
        return 0.02 * jax.random.normal(k, shape, dtype=jnp.float32)

    ones = jnp.ones((dim,), jnp.float32)
    zeros = jnp.zeros((dim,), jnp.float32)
    layers = []
    for l in range(num_layers):
        ks = jax.random.split(jax.random.fold_in(key, l), 18)
        wslab = jnp.stack(
            [nrm(ks[i], (dim, dim)) for i in range(10)]).astype(jnp.bfloat16)
        vslab = jnp.stack([
            ones, zeros,                                            # inter LN g, b
            nrm(ks[10], (dim,)), nrm(ks[11], (dim,)), nrm(ks[12], (dim,)),  # inter bq,bk,bv
            zeros,                                                  # inter bo
            nrm(ks[13], (dim,)), nrm(ks[14], (dim,)), nrm(ks[15], (dim,)),  # intra bq,bk,bv
            zeros,                                                  # intra bo
            ones, zeros,                                            # ff LN g, b
            nrm(ks[16], (dim,)), nrm(ks[17], (dim,)),               # ff b1, b2
        ])
        layers.append(dict(wslab=wslab, vslab=vslab))
    final = dict(gb=jnp.stack([ones, zeros]))
    return layers, final


# ----------------------------------------------------------------------------
if __name__ == "__main__":
    # x: [B, E, S, D]; S must be >= 5 (module indexes [:, :, 4, :]).
    # D = 128 keeps every row / store lane-dense (full 128-lane vectors).
    B, E, S, D = 4, 4, 8, 128
    NUM_HEADS = 4
    NUM_LAYERS = 2

    key = jax.random.PRNGKey(0)
    k_x, k_p = jax.random.split(key)
    x = jax.random.normal(k_x, (B, E, S, D), dtype=jnp.float32)
    layers, final = init_params(k_p, D, NUM_LAYERS)

    fwd = jax.jit(functools.partial(transformer_forward, num_heads=NUM_HEADS))
    out = jax.block_until_ready(fwd(x, layers, final))
    assert out.shape == (B, E, D) and out.dtype == jnp.float32
    assert bool(jnp.all(jnp.isfinite(out)))
    print("KERNEL_OK")
</pallas_src>

<mosaic_0001>
module attributes {stable_mosaic.version = 11 : i64} {
  func.func @_fused_transformer_kernel(%arg0: i32, %arg1: memref<2x4x8x128xf32, #tpu.memory_space<vmem>>, %arg2: memref<10x128x128xbf16, #tpu.memory_space<vmem>>, %arg3: memref<16x128xf32, #tpu.memory_space<vmem>>, %arg4: memref<128x128xf32, #tpu.memory_space<vmem>>, %arg5: memref<2x4x128xf32, #tpu.memory_space<vmem>>) attributes {dimension_semantics = [#tpu.dimension_semantics<parallel>], iteration_bounds = array<i64: 2>, scalar_prefetch = 0 : i64, scratch_operands = 0 : i64, tpu.core_type = #tpu.core_type<tc>, window_params = [{transform_indices = @transform_0, window_bounds = array<i64: 2, 4, 8, 128>}, {pipeline_mode = #tpu.pipeline_mode<synchronous>, transform_indices = @transform_1, window_bounds = array<i64: 10, 128, 128>}, {pipeline_mode = #tpu.pipeline_mode<synchronous>, transform_indices = @transform_2, window_bounds = array<i64: 16, 128>}, {pipeline_mode = #tpu.pipeline_mode<synchronous>, transform_indices = @transform_3, window_bounds = array<i64: 128, 128>}, {transform_indices = @transform_4, window_bounds = array<i64: 2, 4, 128>}]} {
    %c0 = arith.constant 0 : index
    %c0_0 = arith.constant 0 : index
    %c0_1 = arith.constant 0 : index
    %c0_2 = arith.constant 0 : index
    %0 = vector.load %arg1[%c0, %c0_0, %c0_1, %c0_2] : memref<2x4x8x128xf32, #tpu.memory_space<vmem>>, vector<2x4x8x128xf32>
    %c0_3 = arith.constant 0 : index
    %c0_4 = arith.constant 0 : index
    %1 = vector.load %arg3[%c0_3, %c0_4] : memref<16x128xf32, #tpu.memory_space<vmem>>, vector<16x128xf32>
    %c0_5 = arith.constant 0 : index
    %c0_6 = arith.constant 0 : index
    %2 = vector.load %arg4[%c0_5, %c0_6] : memref<128x128xf32, #tpu.memory_space<vmem>>, vector<128x128xf32>
    %3 = vector.extract_strided_slice %1 {offsets = [0, 0], sizes = [1, 128], strides = [1, 1]} : vector<16x128xf32> to vector<1x128xf32>
    %4 = vector.extract_strided_slice %1 {offsets = [1, 0], sizes = [1, 128], strides = [1, 1]} : vector<16x128xf32> to vector<1x128xf32>
    %cst = arith.constant dense<0.000000e+00> : vector<2x4x8xf32>
    %5 = vector.multi_reduction <add>, %0, %cst [3] : vector<2x4x8x128xf32> to vector<2x4x8xf32>
    %6 = vector.shape_cast %5 : vector<2x4x8xf32> to vector<2x4x8x1xf32>
    %cst_7 = arith.constant 1.280000e+02 : f32
    %7 = vector.broadcast %cst_7 : f32 to vector<2x4x8x1xf32>
    %8 = arith.divf %6, %7 : vector<2x4x8x1xf32>
    %9 = vector.broadcast %8 : vector<2x4x8x1xf32> to vector<2x4x8x128xf32>
    %10 = arith.subf %0, %9 : vector<2x4x8x128xf32>
    %11 = arith.mulf %10, %10 : vector<2x4x8x128xf32>
    %cst_8 = arith.constant dense<0.000000e+00> : vector<2x4x8xf32>
    %12 = vector.multi_reduction <add>, %11, %cst_8 [3] : vector<2x4x8x128xf32> to vector<2x4x8xf32>
    %13 = vector.shape_cast %12 : vector<2x4x8xf32> to vector<2x4x8x1xf32>
    %cst_9 = arith.constant 1.280000e+02 : f32
    %14 = vector.broadcast %cst_9 : f32 to vector<2x4x8x1xf32>
    %15 = arith.divf %13, %14 : vector<2x4x8x1xf32>
    %16 = vector.broadcast %8 : vector<2x4x8x1xf32> to vector<2x4x8x128xf32>
    %17 = arith.subf %0, %16 : vector<2x4x8x128xf32>
    %cst_10 = arith.constant 9.99999974E-6 : f32
    %18 = vector.broadcast %cst_10 : f32 to vector<2x4x8x1xf32>
    %19 = arith.addf %15, %18 : vector<2x4x8x1xf32>
    %20 = math.rsqrt %19 : vector<2x4x8x1xf32>
    %21 = vector.broadcast %20 : vector<2x4x8x1xf32> to vector<2x4x8x128xf32>
    %22 = arith.mulf %17, %21 : vector<2x4x8x128xf32>
    %23 = vector.shape_cast %3 : vector<1x128xf32> to vector<1x1x1x128xf32>
    %24 = vector.broadcast %23 : vector<1x1x1x128xf32> to vector<2x4x8x128xf32>
    %25 = arith.mulf %22, %24 : vector<2x4x8x128xf32>
    %26 = vector.shape_cast %4 : vector<1x128xf32> to vector<1x1x1x128xf32>
    %27 = vector.broadcast %26 : vector<1x1x1x128xf32> to vector<2x4x8x128xf32>
    %28 = arith.addf %25, %27 : vector<2x4x8x128xf32>
    %29 = vector.shape_cast %28 : vector<2x4x8x128xf32> to vector<64x128xf32>
    %30 = arith.truncf %29 : vector<64x128xf32> to vector<64x128xbf16>
    %c1 = arith.constant 1 : index
    %c0_11 = arith.constant 0 : index
    %c0_12 = arith.constant 0 : index
    %31 = vector.load %arg2[%c1, %c0_11, %c0_12] : memref<10x128x128xbf16, #tpu.memory_space<vmem>>, vector<1x128x128xbf16>
    %32 = vector.shape_cast %31 : vector<1x128x128xbf16> to vector<128x128xbf16>
    %cst_13 = arith.constant dense<0.000000e+00> : vector<64x128xf32>
    %33 = tpu.matmul %30, %32, %cst_13 {dimension_numbers = #tpu.dot_dimension_numbers<[1], [0], [0], [1], [0, 0, 1, 1], [], []>} : vector<64x128xbf16>, vector<128x128xbf16>, vector<64x128xf32> -> vector<64x128xf32>
    %34 = vector.extract_strided_slice %1 {offsets = [3, 0], sizes = [1, 128], strides = [1, 1]} : vector<16x128xf32> to vector<1x128xf32>
    %35 = vector.broadcast %34 : vector<1x128xf32> to vector<64x128xf32>
    %36 = arith.addf %33, %35 : vector<64x128xf32>
    %c2 = arith.constant 2 : index
    %c0_14 = arith.constant 0 : index
    %c0_15 = arith.constant 0 : index
    %37 = vector.load %arg2[%c2, %c0_14, %c0_15] : memref<10x128x128xbf16, #tpu.memory_space<vmem>>, vector<1x128x128xbf16>
    %38 = vector.shape_cast %37 : vector<1x128x128xbf16> to vector<128x128xbf16>
    %cst_16 = arith.constant dense<0.000000e+00> : vector<64x128xf32>
    %39 = tpu.matmul %30, %38, %cst_16 {dimension_numbers = #tpu.dot_dimension_numbers<[1], [0], [0], [1], [0, 0, 1, 1], [], []>} : vector<64x128xbf16>, vector<128x128xbf16>, vector<64x128xf32> -> vector<64x128xf32>
    %40 = vector.extract_strided_slice %1 {offsets = [4, 0], sizes = [1, 128], strides = [1, 1]} : vector<16x128xf32> to vector<1x128xf32>
    %41 = vector.broadcast %40 : vector<1x128xf32> to vector<64x128xf32>
    %42 = arith.addf %39, %41 : vector<64x128xf32>
    %43 = vector.shape_cast %36 : vector<64x128xf32> to vector<8x8x128xf32>
    %44 = vector.shape_cast %42 : vector<64x128xf32> to vector<8x8x128xf32>
    %45 = vector.extract_strided_slice %28 {offsets = [0, 0, 4, 0], sizes = [2, 4, 1, 128], strides = [1, 1, 1, 1]} : vector<2x4x8x128xf32> to vector<2x4x1x128xf32>
    %46 = vector.shape_cast %45 : vector<2x4x1x128xf32> to vector<2x4x128xf32>
    %47 = vector.shape_cast %46 : vector<2x4x128xf32> to vector<8x128xf32>
    %48 = arith.truncf %47 : vector<8x128xf32> to vector<8x128xbf16>
    %c0_17 = arith.constant 0 : index
    %c0_18 = arith.constant 0 : index
    %c0_19 = arith.constant 0 : index
    %49 = vector.load %arg2[%c0_17, %c0_18, %c0_19] : memref<10x128x128xbf16, #tpu.memory_space<vmem>>, vector<1x128x128xbf16>
    %50 = vector.shape_cast %49 : vector<1x128x128xbf16> to vector<128x128xbf16>
    %cst_20 = arith.constant dense<0.000000e+00> : vector<8x128xf32>
    %51 = tpu.matmul %48, %50, %cst_20 {dimension_numbers = #tpu.dot_dimension_numbers<[1], [0], [0], [1], [0, 0, 1, 1], [], []>} : vector<8x128xbf16>, vector<128x128xbf16>, vector<8x128xf32> -> vector<8x128xf32>
    %52 = vector.extract_strided_slice %1 {offsets = [2, 0], sizes = [1, 128], strides = [1, 1]} : vector<16x128xf32> to vector<1x128xf32>
    %53 = vector.broadcast %52 : vector<1x128xf32> to vector<8x128xf32>
    %54 = arith.addf %51, %53 : vector<8x128xf32>
    %55 = vector.shape_cast %54 : vector<8x128xf32> to vector<8x1x128xf32>
    %56 = vector.broadcast %55 : vector<8x1x128xf32> to vector<8x8x128xf32>
    %57 = arith.mulf %56, %43 : vector<8x8x128xf32>
    %58 = vector.shape_cast %57 : vector<8x8x128xf32> to vector<64x128xf32>
    %cst_21 = arith.constant dense<0.000000e+00> : vector<64x128xf32>
    %59 = tpu.matmul %58, %2, %cst_21 {dimension_numbers = #tpu.dot_dimension_numbers<[1], [0], [0], [1], [0, 0, 1, 1], [], []>} : vector<64x128xf32>, vector<128x128xf32>, vector<64x128xf32> -> vector<64x128xf32>
    %60 = vector.shape_cast %59 : vector<64x128xf32> to vector<8x8x128xf32>
    %cst_22 = arith.constant 0.176776692 : f32
    %61 = vector.broadcast %cst_22 : f32 to vector<8x8x128xf32>
    %62 = arith.mulf %60, %61 : vector<8x8x128xf32>
    %cst_23 = arith.constant dense<0xFF800000> : vector<8x128xf32>
    %63 = vector.multi_reduction <maximumf>, %62, %cst_23 [1] : vector<8x8x128xf32> to vector<8x128xf32>
    %64 = vector.shape_cast %63 : vector<8x128xf32> to vector<8x1x128xf32>
    %65 = vector.broadcast %64 : vector<8x1x128xf32> to vector<8x8x128xf32>
    %66 = arith.subf %62, %65 : vector<8x8x128xf32>
    %67 = math.exp %66 : vector<8x8x128xf32>
    %cst_24 = arith.constant dense<0.000000e+00> : vector<8x128xf32>
    %68 = vector.multi_reduction <add>, %67, %cst_24 [1] : vector<8x8x128xf32> to vector<8x128xf32>
    %69 = vector.shape_cast %68 : vector<8x128xf32> to vector<8x1x128xf32>
    %70 = vector.broadcast %69 : vector<8x1x128xf32> to vector<8x8x128xf32>
    %71 = arith.divf %67, %70 : vector<8x8x128xf32>
    %72 = arith.mulf %71, %44 : vector<8x8x128xf32>
    %cst_25 = arith.constant dense<0.000000e+00> : vector<8x128xf32>
    %73 = vector.multi_reduction <add>, %72, %cst_25 [1] : vector<8x8x128xf32> to vector<8x128xf32>
    %74 = arith.truncf %73 : vector<8x128xf32> to vector<8x128xbf16>
    %c3 = arith.constant 3 : index
    %c0_26 = arith.constant 0 : index
    %c0_27 = arith.constant 0 : index
    %75 = vector.load %arg2[%c3, %c0_26, %c0_27] : memref<10x128x128xbf16, #tpu.memory_space<vmem>>, vector<1x128x128xbf16>
    %76 = vector.shape_cast %75 : vector<1x128x128xbf16> to vector<128x128xbf16>
    %cst_28 = arith.constant dense<0.000000e+00> : vector<8x128xf32>
    %77 = tpu.matmul %74, %76, %cst_28 {dimension_numbers = #tpu.dot_dimension_numbers<[1], [0], [0], [1], [0, 0, 1, 1], [], []>} : vector<8x128xbf16>, vector<128x128xbf16>, vector<8x128xf32> -> vector<8x128xf32>
    %78 = vector.extract_strided_slice %1 {offsets = [5, 0], sizes = [1, 128], strides = [1, 1]} : vector<16x128xf32> to vector<1x128xf32>
    %79 = vector.broadcast %78 : vector<1x128xf32> to vector<8x128xf32>
    %80 = arith.addf %77, %79 : vector<8x128xf32>
    %81 = vector.extract_strided_slice %0 {offsets = [0, 0, 4, 0], sizes = [2, 4, 1, 128], strides = [1, 1, 1, 1]} : vector<2x4x8x128xf32> to vector<2x4x1x128xf32>
    %82 = vector.shape_cast %81 : vector<2x4x1x128xf32> to vector<2x4x128xf32>
    %83 = vector.shape_cast %82 : vector<2x4x128xf32> to vector<8x128xf32>
    %84 = arith.addf %80, %83 : vector<8x128xf32>
    %85 = arith.truncf %84 : vector<8x128xf32> to vector<8x128xbf16>
    %c4 = arith.constant 4 : index
    %c0_29 = arith.constant 0 : index
    %c0_30 = arith.constant 0 : index
    %86 = vector.load %arg2[%c4, %c0_29, %c0_30] : memref<10x128x128xbf16, #tpu.memory_space<vmem>>, vector<1x128x128xbf16>
    %87 = vector.shape_cast %86 : vector<1x128x128xbf16> to vector<128x128xbf16>
    %cst_31 = arith.constant dense<0.000000e+00> : vector<8x128xf32>
    %88 = tpu.matmul %85, %87, %cst_31 {dimension_numbers = #tpu.dot_dimension_numbers<[1], [0], [0], [1], [0, 0, 1, 1], [], []>} : vector<8x128xbf16>, vector<128x128xbf16>, vector<8x128xf32> -> vector<8x128xf32>
    %89 = vector.extract_strided_slice %1 {offsets = [6, 0], sizes = [1, 128], strides = [1, 1]} : vector<16x128xf32> to vector<1x128xf32>
    %90 = vector.broadcast %89 : vector<1x128xf32> to vector<8x128xf32>
    %91 = arith.addf %88, %90 : vector<8x128xf32>
    %c5 = arith.constant 5 : index
    %c0_32 = arith.constant 0 : index
    %c0_33 = arith.constant 0 : index
    %92 = vector.load %arg2[%c5, %c0_32, %c0_33] : memref<10x128x128xbf16, #tpu.memory_space<vmem>>, vector<1x128x128xbf16>
    %93 = vector.shape_cast %92 : vector<1x128x128xbf16> to vector<128x128xbf16>
    %cst_34 = arith.constant dense<0.000000e+00> : vector<8x128xf32>
    %94 = tpu.matmul %85, %93, %cst_34 {dimension_numbers = #tpu.dot_dimension_numbers<[1], [0], [0], [1], [0, 0, 1, 1], [], []>} : vector<8x128xbf16>, vector<128x128xbf16>, vector<8x128xf32> -> vector<8x128xf32>
    %95 = vector.extract_strided_slice %1 {offsets = [7, 0], sizes = [1, 128], strides = [1, 1]} : vector<16x128xf32> to vector<1x128xf32>
    %96 = vector.broadcast %95 : vector<1x128xf32> to vector<8x128xf32>
    %97 = arith.addf %94, %96 : vector<8x128xf32>
    %c6 = arith.constant 6 : index
    %c0_35 = arith.constant 0 : index
    %c0_36 = arith.constant 0 : index
    %98 = vector.load %arg2[%c6, %c0_35, %c0_36] : memref<10x128x128xbf16, #tpu.memory_space<vmem>>, vector<1x128x128xbf16>
    %99 = vector.shape_cast %98 : vector<1x128x128xbf16> to vector<128x128xbf16>
    %cst_37 = arith.constant dense<0.000000e+00> : vector<8x128xf32>
    %100 = tpu.matmul %85, %99, %cst_37 {dimension_numbers = #tpu.dot_dimension_numbers<[1], [0], [0], [1], [0, 0, 1, 1], [], []>} : vector<8x128xbf16>, vector<128x128xbf16>, vector<8x128xf32> -> vector<8x128xf32>
    %101 = vector.extract_strided_slice %1 {offsets = [8, 0], sizes = [1, 128], strides = [1, 1]} : vector<16x128xf32> to vector<1x128xf32>
    %102 = vector.broadcast %101 : vector<1x128xf32> to vector<8x128xf32>
    %103 = arith.addf %100, %102 : vector<8x128xf32>
    %104 = vector.shape_cast %91 : vector<8x128xf32> to vector<2x4x128xf32>
    %105 = vector.shape_cast %97 : vector<8x128xf32> to vector<2x4x128xf32>
    %106 = vector.shape_cast %103 : vector<8x128xf32> to vector<2x4x128xf32>
    %107 = vector.shape_cast %104 : vector<2x4x128xf32> to vector<2x4x1x128xf32>
    %108 = vector.shape_cast %105 : vector<2x4x128xf32> to vector<2x1x4x128xf32>
    %109 = vector.broadcast %107 : vector<2x4x1x128xf32> to vector<2x4x4x128xf32>
    %110 = vector.broadcast %108 : vector<2x1x4x128xf32> to vector<2x4x4x128xf32>
    %111 = arith.mulf %109, %110 : vector<2x4x4x128xf32>
    %112 = vector.shape_cast %111 : vector<2x4x4x128xf32> to vector<8x4x128xf32>
    %113 = vector.shape_cast %106 : vector<2x4x128xf32> to vector<2x1x4x128xf32>
    %114 = vector.shape_cast %113 : vector<2x1x4x128xf32> to vector<2x1x4x128xf32>
    %115 = vector.broadcast %114 : vector<2x1x4x128xf32> to vector<2x4x4x128xf32>
    %116 = vector.shape_cast %115 : vector<2x4x4x128xf32> to vector<8x4x128xf32>
    %117 = vector.shape_cast %112 : vector<8x4x128xf32> to vector<32x128xf32>
    %cst_38 = arith.constant dense<0.000000e+00> : vector<32x128xf32>
    %118 = tpu.matmul %117, %2, %cst_38 {dimension_numbers = #tpu.dot_dimension_numbers<[1], [0], [0], [1], [0, 0, 1, 1], [], []>} : vector<32x128xf32>, vector<128x128xf32>, vector<32x128xf32> -> vector<32x128xf32>
    %119 = vector.shape_cast %118 : vector<32x128xf32> to vector<8x4x128xf32>
    %cst_39 = arith.constant 0.176776692 : f32
    %120 = vector.broadcast %cst_39 : f32 to vector<8x4x128xf32>
    %121 = arith.mulf %119, %120 : vector<8x4x128xf32>
    %cst_40 = arith.constant dense<0xFF800000> : vector<8x128xf32>
    %122 = vector.multi_reduction <maximumf>, %121, %cst_40 [1] : vector<8x4x128xf32> to vector<8x128xf32>
    %123 = vector.shape_cast %122 : vector<8x128xf32> to vector<8x1x128xf32>
    %124 = vector.broadcast %123 : vector<8x1x128xf32> to vector<8x4x128xf32>
    %125 = arith.subf %121, %124 : vector<8x4x128xf32>
    %126 = math.exp %125 : vector<8x4x128xf32>
    %cst_41 = arith.constant dense<0.000000e+00> : vector<8x128xf32>
    %127 = vector.multi_reduction <add>, %126, %cst_41 [1] : vector<8x4x128xf32> to vector<8x128xf32>
    %128 = vector.shape_cast %127 : vector<8x128xf32> to vector<8x1x128xf32>
    %129 = vector.broadcast %128 : vector<8x1x128xf32> to vector<8x4x128xf32>
    %130 = arith.divf %126, %129 : vector<8x4x128xf32>
    %131 = arith.mulf %130, %116 : vector<8x4x128xf32>
    %cst_42 = arith.constant dense<0.000000e+00> : vector<8x128xf32>
    %132 = vector.multi_reduction <add>, %131, %cst_42 [1] : vector<8x4x128xf32> to vector<8x128xf32>
    %133 = arith.truncf %132 : vector<8x128xf32> to vector<8x128xbf16>
    %c7 = arith.constant 7 : index
    %c0_43 = arith.constant 0 : index
    %c0_44 = arith.constant 0 : index
    %134 = vector.load %arg2[%c7, %c0_43, %c0_44] : memref<10x128x128xbf16, #tpu.memory_space<vmem>>, vector<1x128x128xbf16>
    %135 = vector.shape_cast %134 : vector<1x128x128xbf16> to vector<128x128xbf16>
    %cst_45 = arith.constant dense<0.000000e+00> : vector<8x128xf32>
    %136 = tpu.matmul %133, %135, %cst_45 {dimension_numbers = #tpu.dot_dimension_numbers<[1], [0], [0], [1], [0, 0, 1, 1], [], []>} : vector<8x128xbf16>, vector<128x128xbf16>, vector<8x128xf32> -> vector<8x128xf32>
    %137 = vector.extract_strided_slice %1 {offsets = [9, 0], sizes = [1, 128], strides = [1, 1]} : vector<16x128xf32> to vector<1x128xf32>
    %138 = vector.broadcast %137 : vector<1x128xf32> to vector<8x128xf32>
    %139 = arith.addf %136, %138 : vector<8x128xf32>
    %140 = arith.addf %139, %84 : vector<8x128xf32>
    %141 = vector.extract_strided_slice %1 {offsets = [10, 0], sizes = [1, 128], strides = [1, 1]} : vector<16x128xf32> to vector<1x128xf32>
    %142 = vector.extract_strided_slice %1 {offsets = [11, 0], sizes = [1, 128], strides = [1, 1]} : vector<16x128xf32> to vector<1x128xf32>
    %cst_46 = arith.constant dense<0.000000e+00> : vector<8xf32>
    %143 = vector.multi_reduction <add>, %140, %cst_46 [1] : vector<8x128xf32> to vector<8xf32>
    %144 = vector.shape_cast %143 : vector<8xf32> to vector<8x1xf32>
    %cst_47 = arith.constant 1.280000e+02 : f32
    %145 = vector.broadcast %cst_47 : f32 to vector<8x1xf32>
    %146 = arith.divf %144, %145 : vector<8x1xf32>
    %147 = vector.broadcast %146 : vector<8x1xf32> to vector<8x128xf32>
    %148 = arith.subf %140, %147 : vector<8x128xf32>
    %149 = arith.mulf %148, %148 : vector<8x128xf32>
    %cst_48 = arith.constant dense<0.000000e+00> : vector<8xf32>
    %150 = vector.multi_reduction <add>, %149, %cst_48 [1] : vector<8x128xf32> to vector<8xf32>
    %151 = vector.shape_cast %150 : vector<8xf32> to vector<8x1xf32>
    %cst_49 = arith.constant 1.280000e+02 : f32
    %152 = vector.broadcast %cst_49 : f32 to vector<8x1xf32>
    %153 = arith.divf %151, %152 : vector<8x1xf32>
    %154 = vector.broadcast %146 : vector<8x1xf32> to vector<8x128xf32>
    %155 = arith.subf %140, %154 : vector<8x128xf32>
    %cst_50 = arith.constant 9.99999974E-6 : f32
    %156 = vector.broadcast %cst_50 : f32 to vector<8x1xf32>
    %157 = arith.addf %153, %156 : vector<8x1xf32>
    %158 = math.rsqrt %157 : vector<8x1xf32>
    %159 = vector.broadcast %158 : vector<8x1xf32> to vector<8x128xf32>
    %160 = arith.mulf %155, %159 : vector<8x128xf32>
    %161 = vector.broadcast %141 : vector<1x128xf32> to vector<8x128xf32>
    %162 = arith.mulf %160, %161 : vector<8x128xf32>
    %163 = vector.broadcast %142 : vector<1x128xf32> to vector<8x128xf32>
    %164 = arith.addf %162, %163 : vector<8x128xf32>
    %165 = arith.truncf %164 : vector<8x128xf32> to vector<8x128xbf16>
    %c8 = arith.constant 8 : index
    %c0_51 = arith.constant 0 : index
    %c0_52 = arith.constant 0 : index
    %166 = vector.load %arg2[%c8, %c0_51, %c0_52] : memref<10x128x128xbf16, #tpu.memory_space<vmem>>, vector<1x128x128xbf16>
    %167 = vector.shape_cast %166 : vector<1x128x128xbf16> to vector<128x128xbf16>
    %cst_53 = arith.constant dense<0.000000e+00> : vector<8x128xf32>
    %168 = tpu.matmul %165, %167, %cst_53 {dimension_numbers = #tpu.dot_dimension_numbers<[1], [0], [0], [1], [0, 0, 1, 1], [], []>} : vector<8x128xbf16>, vector<128x128xbf16>, vector<8x128xf32> -> vector<8x128xf32>
    %169 = vector.extract_strided_slice %1 {offsets = [12, 0], sizes = [1, 128], strides = [1, 1]} : vector<16x128xf32> to vector<1x128xf32>
    %170 = vector.broadcast %169 : vector<1x128xf32> to vector<8x128xf32>
    %171 = arith.addf %168, %170 : vector<8x128xf32>
    %cst_54 = arith.constant 5.000000e-01 : f32
    %172 = vector.broadcast %cst_54 : f32 to vector<8x128xf32>
    %173 = arith.mulf %172, %171 : vector<8x128xf32>
    %cst_55 = arith.constant 4.471500e-02 : f32
    %174 = vector.broadcast %cst_55 : f32 to vector<8x128xf32>
    %175 = arith.mulf %174, %171 : vector<8x128xf32>
    %176 = arith.mulf %175, %171 : vector<8x128xf32>
    %177 = arith.mulf %176, %171 : vector<8x128xf32>
    %178 = arith.addf %171, %177 : vector<8x128xf32>
    %cst_56 = arith.constant 0.797884583 : f32
    %179 = vector.broadcast %cst_56 : f32 to vector<8x128xf32>
    %180 = arith.mulf %179, %178 : vector<8x128xf32>
    %181 = math.tanh %180 : vector<8x128xf32>
    %cst_57 = arith.constant 1.000000e+00 : f32
    %182 = vector.broadcast %cst_57 : f32 to vector<8x128xf32>
    %183 = arith.addf %182, %181 : vector<8x128xf32>
    %184 = arith.mulf %173, %183 : vector<8x128xf32>
    %185 = arith.truncf %184 : vector<8x128xf32> to vector<8x128xbf16>
    %c9 = arith.constant 9 : index
    %c0_58 = arith.constant 0 : index
    %c0_59 = arith.constant 0 : index
    %186 = vector.load %arg2[%c9, %c0_58, %c0_59] : memref<10x128x128xbf16, #tpu.memory_space<vmem>>, vector<1x128x128xbf16>
    %187 = vector.shape_cast %186 : vector<1x128x128xbf16> to vector<128x128xbf16>
    %cst_60 = arith.constant dense<0.000000e+00> : vector<8x128xf32>
    %188 = tpu.matmul %185, %187, %cst_60 {dimension_numbers = #tpu.dot_dimension_numbers<[1], [0], [0], [1], [0, 0, 1, 1], [], []>} : vector<8x128xbf16>, vector<128x128xbf16>, vector<8x128xf32> -> vector<8x128xf32>
    %189 = vector.extract_strided_slice %1 {offsets = [13, 0], sizes = [1, 128], strides = [1, 1]} : vector<16x128xf32> to vector<1x128xf32>
    %190 = vector.broadcast %189 : vector<1x128xf32> to vector<8x128xf32>
    %191 = arith.addf %188, %190 : vector<8x128xf32>
    %192 = arith.addf %191, %140 : vector<8x128xf32>
    %193 = vector.extract_strided_slice %1 {offsets = [14, 0], sizes = [1, 128], strides = [1, 1]} : vector<16x128xf32> to vector<1x128xf32>
    %194 = vector.extract_strided_slice %1 {offsets = [15, 0], sizes = [1, 128], strides = [1, 1]} : vector<16x128xf32> to vector<1x128xf32>
    %cst_61 = arith.constant dense<0.000000e+00> : vector<8xf32>
    %195 = vector.multi_reduction <add>, %192, %cst_61 [1] : vector<8x128xf32> to vector<8xf32>
    %196 = vector.shape_cast %195 : vector<8xf32> to vector<8x1xf32>
    %cst_62 = arith.constant 1.280000e+02 : f32
    %197 = vector.broadcast %cst_62 : f32 to vector<8x1xf32>
    %198 = arith.divf %196, %197 : vector<8x1xf32>
    %199 = vector.broadcast %198 : vector<8x1xf32> to vector<8x128xf32>
    %200 = arith.subf %192, %199 : vector<8x128xf32>
    %201 = arith.mulf %200, %200 : vector<8x128xf32>
    %cst_63 = arith.constant dense<0.000000e+00> : vector<8xf32>
    %202 = vector.multi_reduction <add>, %201, %cst_63 [1] : vector<8x128xf32> to vector<8xf32>
    %203 = vector.shape_cast %202 : vector<8xf32> to vector<8x1xf32>
    %cst_64 = arith.constant 1.280000e+02 : f32
    %204 = vector.broadcast %cst_64 : f32 to vector<8x1xf32>
    %205 = arith.divf %203, %204 : vector<8x1xf32>
    %206 = vector.broadcast %198 : vector<8x1xf32> to vector<8x128xf32>
    %207 = arith.subf %192, %206 : vector<8x128xf32>
    %cst_65 = arith.constant 9.99999974E-6 : f32
    %208 = vector.broadcast %cst_65 : f32 to vector<8x1xf32>
    %209 = arith.addf %205, %208 : vector<8x1xf32>
    %210 = math.rsqrt %209 : vector<8x1xf32>
    %211 = vector.broadcast %210 : vector<8x1xf32> to vector<8x128xf32>
    %212 = arith.mulf %207, %211 : vector<8x128xf32>
    %213 = vector.broadcast %193 : vector<1x128xf32> to vector<8x128xf32>
    %214 = arith.mulf %212, %213 : vector<8x128xf32>
    %215 = vector.broadcast %194 : vector<1x128xf32> to vector<8x128xf32>
    %216 = arith.addf %214, %215 : vector<8x128xf32>
    %217 = vector.shape_cast %216 : vector<8x128xf32> to vector<2x4x128xf32>
    %c0_66 = arith.constant 0 : index
    %c0_67 = arith.constant 0 : index
    %c0_68 = arith.constant 0 : index
    %218 = vector.load %arg5[%c0_66, %c0_67, %c0_68] : memref<2x4x128xf32, #tpu.memory_space<vmem>>, vector<2x4x128xf32>
    tpu.vector_store %arg5[%c0_66, %c0_67, %c0_68], %217 {strides = array<i32>} : memref<2x4x128xf32, #tpu.memory_space<vmem>>, vector<2x4x128xf32>,
    return
  }
  func.func @transform_0(%arg0: i32) -> (i32, i32, i32, i32) {
    %c0_i32 = arith.constant 0 : i32
    %c0_i32_0 = arith.constant 0 : i32
    %c0_i32_1 = arith.constant 0 : i32
    %c0_i32_2 = arith.constant 0 : i32
    return %arg0, %c0_i32, %c0_i32_0, %c0_i32_1 : i32, i32, i32, i32
  }
  func.func @transform_1(%arg0: i32) -> (i32, i32, i32) {
    %c0_i32 = arith.constant 0 : i32
    %c0_i32_0 = arith.constant 0 : i32
    %c0_i32_1 = arith.constant 0 : i32
    %c0_i32_2 = arith.constant 0 : i32
    return %c0_i32, %c0_i32_0, %c0_i32_1 : i32, i32, i32
  }
  func.func @transform_2(%arg0: i32) -> (i32, i32) {
    %c0_i32 = arith.constant 0 : i32
    %c0_i32_0 = arith.constant 0 : i32
    %c0_i32_1 = arith.constant 0 : i32
    return %c0_i32, %c0_i32_0 : i32, i32
  }
  func.func @transform_3(%arg0: i32) -> (i32, i32) {
    %c0_i32 = arith.constant 0 : i32
    %c0_i32_0 = arith.constant 0 : i32
    %c0_i32_1 = arith.constant 0 : i32
    return %c0_i32, %c0_i32_0 : i32, i32
  }
  func.func @transform_4(%arg0: i32) -> (i32, i32, i32) {
    %c0_i32 = arith.constant 0 : i32
    %c0_i32_0 = arith.constant 0 : i32
    %c0_i32_1 = arith.constant 0 : i32
    return %arg0, %c0_i32, %c0_i32_0 : i32, i32, i32
  }
}

</mosaic_0001>

<llo_original>
// kernel: transformer_forward.1
$region0: #{transformer_forward.1}
  #allocation0 [shape = 'u32[]', space=smem, size = 0x4, offset = 0x4, fixed_abs, tag = 'smem constant byte address 0x4 - core index']
  #allocation1 [shape = 'u32[72,128]{1,0:T(1,128)}', space=vmem, size = 0x9000, scoped, tag = 'internal scratch']
  %s0 = inlined_call_operand.vmem [shape: f32[4,4,8,128], index: 0, kind: input, shape index: {}]
  %s1 = inlined_call_operand.hbm [shape: bf16[10,128,128], index: 1, kind: input, shape index: {}]
  %s2 = inlined_call_operand.vmem [shape: f32[16,128], index: 2, kind: input, shape index: {}]
  %s3 = inlined_call_operand.vmem [shape: f32[128,128], index: 3, kind: input, shape index: {}]
  %s4 = inlined_call_operand.hbm [shape: f32[4,4,128], index: 4, kind: output, shape index: {}]
  %s5 = sld [smem:[#allocation0]]
  $region53: #{transformer_forward.1} parent=0
    _
  %s7 = ssub.s32 1, %s5
  %s8 = scalar_select 0, %s7, %s5
  $region1: #{transformer_forward.1} parent=0
    #allocation2 [shape = 'u8[327680]{0}', space=vmem, size = 0x50000, scoped, tag = 'input window, operand 1, single buffered']
    #allocation3 [shape = 's32[2]{0}', space=sflag, size = 0x8, scoped, tag = 'scoped memory for transformer_forward.1']
    #allocation4 [shape = 's32[2]{0}', space=sflag, size = 0x8, scoped, tag = 'scoped memory for transformer_forward.1']
    #allocation5 [shape = 'u8[8192]{0}', space=vmem, size = 0x2000, scoped, tag = 'output window, operand 0']
    %9 = vsyncpa [#allocation3], 0
    %10 = vsyncpa [#allocation4], 0
    %s11 = scalar_lea.sflag [#allocation4], 1
    %12 = vsyncpa %s11, 0
    loop: start=0, step=1, limit=4
    $region2: #{transformer_forward.1} parent=1 // loop_pre_header
      _
    $region3: #{transformer_forward.1} parent=1 // loop_header
      %s14 = sphi 0, %s18
      %p15 = scmp.ge.s32.totalorder %s14, 4
      %s24 = sphi 0, %s26
      %s27 = sphi 0, %s24
      %s28 = sphi 0, %s27
      %s44 = sphi 0, %s28
      %s48 = sphi 0, %s48
      %s50 = sphi 0, %s48
      %s51 = sphi 0, %s50
      %s65 = sphi 0, %s51
      %s69 = sphi 0, %s69
      %s71 = sphi 0, %s69
      %s72 = sphi 0, %s71
      %s86 = sphi 0, %s72
      %s90 = sphi 0, %s90
      %s92 = sphi 0, %s90
      %s93 = sphi 0, %s92
      %s107 = sphi 0, %s93
      %s113 = sphi 0, %s115
      %s116 = sphi 0, %s113
      %s117 = sphi 0, %s116
      %s133 = sphi 0, %s117
    $region4: #{transformer_forward.1} parent=1 // loop_header_branch
      %17 = sbr.rel (%p15) target = $region8
    $region5: #{transformer_forward.1} parent=1 // loop_body
      %s19 = ssub.s32 %s14, 1
      %s20 = ssub.s32 %s14, 2
      %s21 = sadd.s32 %s14, 1
      %s22 = ssub.s32 %s14, %s21
      %p23 = scmp.eq.s32.totalorder %s22, 0
      %s25 = sadd.s32 %s24, 1
      %s26 = scalar_select %p23, %s24, %s25
      %p29 = pneg %p23
      %p30 = scmp.eq.s32.totalorder %s14, 1
      %p31 = por %p29, %p30
      %p32 = scmp.ne.s32.totalorder %s24, %s27
      %p33 = scmp.eq.s32.totalorder %s14, 0
      %p34 = por %p32, %p33
      %p35 = scmp.ne.s32.totalorder %s24, %s27
      %p36 = scmp.eq.s32.totalorder %s19, 1
      %p37 = por %p35, %p36
      %p38 = scmp.ne.s32.totalorder %s27, %s28
      %p39 = scmp.eq.s32.totalorder %s19, 0
      %p40 = por %p38, %p39
      %p41 = scmp.ne.s32.totalorder %s27, %s28
      %p42 = scmp.eq.s32.totalorder %s20, 1
      %p43 = por %p41, %p42
      %p45 = scmp.ne.s32.totalorder %s28, %s44
      %p46 = scmp.eq.s32.totalorder %s20, 0
      %p47 = por %p45, %p46
      %s49 = sadd.s32 %s48, 1
      %p52 = scmp.eq.s32.totalorder %s14, 1
      %p53 = scmp.ne.s32.totalorder %s48, %s50
      %p54 = scmp.eq.s32.totalorder %s14, 0
      %p55 = por %p53, %p54
      %p56 = scmp.ne.s32.totalorder %s48, %s50
      %p57 = scmp.eq.s32.totalorder %s19, 1
      %p58 = por %p56, %p57
      %p59 = scmp.ne.s32.totalorder %s50, %s51
      %p60 = scmp.eq.s32.totalorder %s19, 0
      %p61 = por %p59, %p60
      %p62 = scmp.ne.s32.totalorder %s50, %s51
      %p63 = scmp.eq.s32.totalorder %s20, 1
      %p64 = por %p62, %p63
      %p66 = scmp.ne.s32.totalorder %s51, %s65
      %p67 = scmp.eq.s32.totalorder %s20, 0
      %p68 = por %p66, %p67
      %s70 = sadd.s32 %s69, 1
      %p73 = scmp.eq.s32.totalorder %s14, 1
      %p74 = scmp.ne.s32.totalorder %s69, %s71
      %p75 = scmp.eq.s32.totalorder %s14, 0
      %p76 = por %p74, %p75
      %p77 = scmp.ne.s32.totalorder %s69, %s71
      %p78 = scmp.eq.s32.totalorder %s19, 1
      %p79 = por %p77, %p78
      %p80 = scmp.ne.s32.totalorder %s71, %s72
      %p81 = scmp.eq.s32.totalorder %s19, 0
      %p82 = por %p80, %p81
      %p83 = scmp.ne.s32.totalorder %s71, %s72
      %p84 = scmp.eq.s32.totalorder %s20, 1
      %p85 = por %p83, %p84
      %p87 = scmp.ne.s32.totalorder %s72, %s86
      %p88 = scmp.eq.s32.totalorder %s20, 0
      %p89 = por %p87, %p88
      %s91 = sadd.s32 %s90, 1
      %p94 = scmp.eq.s32.totalorder %s14, 1
      %p95 = scmp.ne.s32.totalorder %s90, %s92
      %p96 = scmp.eq.s32.totalorder %s14, 0
      %p97 = por %p95, %p96
      %p98 = scmp.ne.s32.totalorder %s90, %s92
      %p99 = scmp.eq.s32.totalorder %s19, 1
      %p100 = por %p98, %p99
      %p101 = scmp.ne.s32.totalorder %s92, %s93
      %p102 = scmp.eq.s32.totalorder %s19, 0
      %p103 = por %p101, %p102
      %p104 = scmp.ne.s32.totalorder %s92, %s93
      %p105 = scmp.eq.s32.totalorder %s20, 1
      %p106 = por %p104, %p105
      %p108 = scmp.ne.s32.totalorder %s93, %s107
      %p109 = scmp.eq.s32.totalorder %s20, 0
      %p110 = por %p108, %p109
      %s111 = ssub.s32 %s14, %s21
      %p112 = scmp.eq.s32.totalorder %s111, 0
      %s114 = sadd.s32 %s113, 1
      %s115 = scalar_select %p112, %s113, %s114
      %p118 = pneg %p112
      %p119 = scmp.eq.s32.totalorder %s14, 1
      %p120 = por %p118, %p119
      %p121 = scmp.ne.s32.totalorder %s113, %s116
      %p122 = scmp.eq.s32.totalorder %s14, 0
      %p123 = por %p121, %p122
      %p124 = scmp.ne.s32.totalorder %s113, %s116
      %p125 = scmp.eq.s32.totalorder %s19, 1
      %p126 = por %p124, %p125
      %p127 = scmp.ne.s32.totalorder %s116, %s117
      %p128 = scmp.eq.s32.totalorder %s19, 0
      %p129 = por %p127, %p128
      %p130 = scmp.ne.s32.totalorder %s116, %s117
      %p131 = scmp.eq.s32.totalorder %s20, 1
      %p132 = por %p130, %p131
      %p134 = scmp.ne.s32.totalorder %s117, %s133
      %p135 = scmp.eq.s32.totalorder %s20, 0
      %p136 = por %p134, %p135
      %p137 = scmp.le.s32.totalorder 1, %s14
      %p138 = scmp.lt.s32.totalorder %s14, 3
      %p139 = pnand %p137, %p138
      %p140 = pneg %p139
      // Predicated region
      $region9: #{transformer_forward.1} parent=5 // pred_check
        _
      $region10: #{transformer_forward.1} parent=5 // pred_check_branch
        %142 = sbr.rel (%p139) target = $region12
      $region11: #{transformer_forward.1} parent=5 // pred_region
        %s143 = ssub.s32 %s14, 1
        // Predicated region
        $region13: #{transformer_forward.1} parent=11 // pred_check
          %p144 = pneg %p61
        $region14: #{transformer_forward.1} parent=11 // pred_check_branch
          %146 = sbr.rel (%p144) target = $region16
        $region15: #{transformer_forward.1} parent=11 // pred_region
          %148 = vsyncadd [#allocation3], 0
          %s149 = sshll.u32 %s1, 4
          %s150 = int_to_ptr.hbm [resolvable:$true] %s149
          %s151 = sshll.u32 [#allocation2], 4
          %s152 = int_to_ptr.vmem [resolvable:$true] %s151
          %157 = dma.hbm_to_vmem [thread:$0]  %s150, 10240, %s152, [#allocation3], 64, 64, 4
        $region16: #{transformer_forward.1} parent=11 // pred_fallthru
          _
        // Predicated region
        $region17: #{transformer_forward.1} parent=11 // pred_check
          %p158 = pneg %p82
        $region18: #{transformer_forward.1} parent=11 // pred_check_branch
          %160 = sbr.rel (%p158) target = $region20
        $region19: #{transformer_forward.1} parent=11 // pred_region
          _
        $region20: #{transformer_forward.1} parent=11 // pred_fallthru
          _
        // Predicated region
        $region21: #{transformer_forward.1} parent=11 // pred_check
          %p161 = pneg %p103
        $region22: #{transformer_forward.1} parent=11 // pred_check_branch
          %163 = sbr.rel (%p161) target = $region24
        $region23: #{transformer_forward.1} parent=11 // pred_region
          _
        $region24: #{transformer_forward.1} parent=11 // pred_fallthru
          _
      $region12: #{transformer_forward.1} parent=5 // pred_fallthru
        _
      %p164 = scmp.lt.s32.totalorder %s14, 2
      // Predicated region
      $region25: #{transformer_forward.1} parent=5 // pred_check
        %p165 = pneg %p164
      $region26: #{transformer_forward.1} parent=5 // pred_check_branch
        %167 = sbr.rel (%p165) target = $region28
      $region27: #{transformer_forward.1} parent=5 // pred_region
        // Predicated region
        $region29: #{transformer_forward.1} parent=27 // pred_check
          %p168 = pneg %p34
        $region30: #{transformer_forward.1} parent=27 // pred_check_branch
          %170 = sbr.rel (%p168) target = $region32
        $region31: #{transformer_forward.1} parent=27 // pred_region
          %s171 = smul.u32 2, %s14
          %p172 = scmp.lt.s32.totalorder %s171, 3
          %s173 = scalar_select %p172, %s171, 3
          %s174 = smul.addr %s173, 4
          %s175 = smul.addr %s174, 8
          %s176 = scalar_lea.vmem %s0, %s175
          %s177 = smul.u32 2, %s14
        $region32: #{transformer_forward.1} parent=27 // pred_fallthru
          _
      $region28: #{transformer_forward.1} parent=5 // pred_fallthru
        _
      %p178 = scmp.le.s32.totalorder 1, %s14
      %p179 = scmp.lt.s32.totalorder %s14, 3
      %p180 = pnand %p178, %p179
      %p181 = pneg %p180
      // Predicated region
      $region33: #{transformer_forward.1} parent=5 // pred_check
        _
      $region34: #{transformer_forward.1} parent=5 // pred_check_branch
        %183 = sbr.rel (%p180) target = $region36
      $region35: #{transformer_forward.1} parent=5 // pred_region
        %s184 = ssub.s32 %s14, 1
        // Predicated region
        $region37: #{transformer_forward.1} parent=35 // pred_check
          %p185 = pneg %p61
        $region38: #{transformer_forward.1} parent=35 // pred_check_branch
          %187 = sbr.rel (%p185) target = $region40
        $region39: #{transformer_forward.1} parent=35 // pred_region
          %189 = dma.done [#allocation3], 10240
        $region40: #{transformer_forward.1} parent=35 // pred_fallthru
          _
        %s190 = smul.u32 2, %s19
        %p191 = scmp.lt.s32.totalorder %s190, 3
        %s192 = scalar_select %p191, %s190, 3
        %s193 = smul.addr %s192, 4
        %s194 = smul.addr %s193, 8
        %s195 = scalar_lea.vmem %s0, %s194
        %p196 = pneg %p40
        %p197 = pneg %p37
        %p198 = pneg %p61
        %p199 = pneg %p58
        %p200 = pneg %p82
        %p201 = pneg %p79
        %p202 = pneg %p103
        %p203 = pneg %p100
        %p204 = pneg %p129
        %p205 = pneg %p126
        %s206 = sand.u32 %s116, 1
        %s207 = scalar_lea.sflag [#allocation4], %s206
        %s208 = sand.u32 %s116, 1
        %s209 = smul.addr %s208, 8
        %s210 = scalar_lea.vmem [#allocation5], %s209
        %s211 = smul.u32 2, %s19
        %p212 = scmp.lt.s32.totalorder %s211, 3
        %s213 = scalar_select %p212, %s211, 3
        %s214 = smul.addr %s213, 4
        %s215 = smul.addr %s214, 8
        %s216 = scalar_lea.vmem %s0, %s215
        %s217 = smul.u32 2, %s19
        %s218 = smul.u32 2, %s19
        %v219 = vld [vmem:[%s216] sm:$0xff]
        %v220 = vld [vmem:[%s216 + $0x8] sm:$0xff]
        %v221 = vld [vmem:[%s216 + $0x10] sm:$0xff]
        %v222 = vld [vmem:[%s216 + $0x18] sm:$0xff]
        %v223 = vld [vmem:[%s216 + $0x20] sm:$0xff]
        %v224 = vld [vmem:[%s216 + $0x28] sm:$0xff]
        %v225 = vld [vmem:[%s216 + $0x30] sm:$0xff]
        %v226 = vld [vmem:[%s216 + $0x38] sm:$0xff]
        %v227 = vld [vmem:[%s2] sm:$0xff]
        %v228 = vld [vmem:[%s2 + $0x8] sm:$0xff]
        %v229 = vld [vmem:[%s3] sm:$0xff]
        %v230 = vld [vmem:[%s3 + $0x8] sm:$0xff]
        %v231 = vld [vmem:[%s3 + $0x10] sm:$0xff]
        %v232 = vld [vmem:[%s3 + $0x18] sm:$0xff]
        %v233 = vld [vmem:[%s3 + $0x20] sm:$0xff]
        %v234 = vld [vmem:[%s3 + $0x28] sm:$0xff]
        %v235 = vld [vmem:[%s3 + $0x30] sm:$0xff]
        %v236 = vld [vmem:[%s3 + $0x38] sm:$0xff]
        %v237 = vld [vmem:[%s3 + $0x40] sm:$0xff]
        %v238 = vld [vmem:[%s3 + $0x48] sm:$0xff]
        %v239 = vld [vmem:[%s3 + $0x50] sm:$0xff]
        %v240 = vld [vmem:[%s3 + $0x58] sm:$0xff]
        %v241 = vld [vmem:[%s3 + $0x60] sm:$0xff]
        %v242 = vld [vmem:[%s3 + $0x68] sm:$0xff]
        %v243 = vld [vmem:[%s3 + $0x70] sm:$0xff]
        %v244 = vld [vmem:[%s3 + $0x78] sm:$0xff]
        %245 = vadd.xlane.f32.xlu0 %v219
        %v246 = vpop.xlane.xlu0 %245
        %247 = vadd.xlane.f32.xlu0 %v220
        %v248 = vpop.xlane.xlu0 %247
        %249 = vadd.xlane.f32.xlu0 %v221
        %v250 = vpop.xlane.xlu0 %249
        %251 = vadd.xlane.f32.xlu0 %v222
        %v252 = vpop.xlane.xlu0 %251
        %253 = vadd.xlane.f32.xlu0 %v223
        %v254 = vpop.xlane.xlu0 %253
        %255 = vadd.xlane.f32.xlu0 %v224
        %v256 = vpop.xlane.xlu0 %255
        %257 = vadd.xlane.f32.xlu0 %v225
        %v258 = vpop.xlane.xlu0 %257
        %259 = vadd.xlane.f32.xlu0 %v226
        %v260 = vpop.xlane.xlu0 %259
        %v261 = vrcp.pop 128.0
        %v262 = vmul.f32 128.0, %v261
        %v263 = vsub.f32 1.0, %v262
        %v264 = vmul.f32 %v261, %v263
        %v265 = vadd.f32 %v261, %v264
        %vm266 = vweird.f32 %v261
        %v267 = vsel %vm266, %v261, %v265
        %v268 = vmul.f32 %v246, %v267
        %v269 = vmul.f32 %v248, %v267
        %v270 = vmul.f32 %v250, %v267
        %v271 = vmul.f32 %v252, %v267
        %v272 = vmul.f32 %v254, %v267
        %v273 = vmul.f32 %v256, %v267
        %v274 = vmul.f32 %v258, %v267
        %v275 = vmul.f32 %v260, %v267
        %v276 = vsub.f32 %v219, %v268
        %v277 = vsub.f32 %v220, %v269
        %v278 = vsub.f32 %v221, %v270
        %v279 = vsub.f32 %v222, %v271
        %v280 = vsub.f32 %v223, %v272
        %v281 = vsub.f32 %v224, %v273
        %v282 = vsub.f32 %v225, %v274
        %v283 = vsub.f32 %v226, %v275
        %v284 = vmul.f32 %v276, %v276
        %v285 = vmul.f32 %v277, %v277
        %v286 = vmul.f32 %v278, %v278
        %v287 = vmul.f32 %v279, %v279
        %v288 = vmul.f32 %v280, %v280
        %v289 = vmul.f32 %v281, %v281
        %v290 = vmul.f32 %v282, %v282
        %v291 = vmul.f32 %v283, %v283
        %292 = vadd.xlane.f32.xlu0 %v284
        %v293 = vpop.xlane.xlu0 %292
        %294 = vadd.xlane.f32.xlu0 %v285
        %v295 = vpop.xlane.xlu0 %294
        %296 = vadd.xlane.f32.xlu0 %v286
        %v297 = vpop.xlane.xlu0 %296
        %298 = vadd.xlane.f32.xlu0 %v287
        %v299 = vpop.xlane.xlu0 %298
        %300 = vadd.xlane.f32.xlu0 %v288
        %v301 = vpop.xlane.xlu0 %300
        %302 = vadd.xlane.f32.xlu0 %v289
        %v303 = vpop.xlane.xlu0 %302
        %304 = vadd.xlane.f32.xlu0 %v290
        %v305 = vpop.xlane.xlu0 %304
        %306 = vadd.xlane.f32.xlu0 %v291
        %v307 = vpop.xlane.xlu0 %306
        %v308 = vmul.f32 %v293, %v267
        %v309 = vmul.f32 %v295, %v267
        %v310 = vmul.f32 %v297, %v267
        %v311 = vmul.f32 %v299, %v267
        %v312 = vmul.f32 %v301, %v267
        %v313 = vmul.f32 %v303, %v267
        %v314 = vmul.f32 %v305, %v267
        %v315 = vmul.f32 %v307, %v267
        %v316 = vadd.f32 %v308, 1e-05
        %v317 = vadd.f32 %v309, 1e-05
        %v318 = vadd.f32 %v310, 1e-05
        %v319 = vadd.f32 %v311, 1e-05
        %v320 = vadd.f32 %v312, 1e-05
        %v321 = vadd.f32 %v313, 1e-05
        %v322 = vadd.f32 %v314, 1e-05
        %v323 = vadd.f32 %v315, 1e-05
        %v324 = vrsqrt.pop %v316
        %v325 = vmul.f32 %v324, %v316
        %v326 = vmul.f32 %v325, %v324
        %v327 = vmul.f32 0.5, %v326
        %v328 = vsub.f32 1.5, %v327
        %v329 = vmul.f32 %v324, %v328
        %vm330 = vweird.f32 %v316
        %vm331 = vweird.f32 %v324
        %vm332 = vmor %vm330, %vm331
        %v333 = vsel %vm332, %v324, %v329
        %v334 = vrsqrt.pop %v317
        %v335 = vmul.f32 %v334, %v317
        %v336 = vmul.f32 %v335, %v334
        %v337 = vmul.f32 0.5, %v336
        %v338 = vsub.f32 1.5, %v337
        %v339 = vmul.f32 %v334, %v338
        %vm340 = vweird.f32 %v317
        %vm341 = vweird.f32 %v334
        %vm342 = vmor %vm340, %vm341
        %v343 = vsel %vm342, %v334, %v339
        %v344 = vrsqrt.pop %v318
        %v345 = vmul.f32 %v344, %v318
        %v346 = vmul.f32 %v345, %v344
        %v347 = vmul.f32 0.5, %v346
        %v348 = vsub.f32 1.5, %v347
        %v349 = vmul.f32 %v344, %v348
        %vm350 = vweird.f32 %v318
        %vm351 = vweird.f32 %v344
        %vm352 = vmor %vm350, %vm351
        %v353 = vsel %vm352, %v344, %v349
        %v354 = vrsqrt.pop %v319
        %v355 = vmul.f32 %v354, %v319
        %v356 = vmul.f32 %v355, %v354
        %v357 = vmul.f32 0.5, %v356
        %v358 = vsub.f32 1.5, %v357
        %v359 = vmul.f32 %v354, %v358
        %vm360 = vweird.f32 %v319
        %vm361 = vweird.f32 %v354
        %vm362 = vmor %vm360, %vm361
        %v363 = vsel %vm362, %v354, %v359
        %v364 = vrsqrt.pop %v320
        %v365 = vmul.f32 %v364, %v320
        %v366 = vmul.f32 %v365, %v364
        %v367 = vmul.f32 0.5, %v366
        %v368 = vsub.f32 1.5, %v367
        %v369 = vmul.f32 %v364, %v368
        %vm370 = vweird.f32 %v320
        %vm371 = vweird.f32 %v364
        %vm372 = vmor %vm370, %vm371
        %v373 = vsel %vm372, %v364, %v369
        %v374 = vrsqrt.pop %v321
        %v375 = vmul.f32 %v374, %v321
        %v376 = vmul.f32 %v375, %v374
        %v377 = vmul.f32 0.5, %v376
        %v378 = vsub.f32 1.5, %v377
        %v379 = vmul.f32 %v374, %v378
        %vm380 = vweird.f32 %v321
        %vm381 = vweird.f32 %v374
        %vm382 = vmor %vm380, %vm381
        %v383 = vsel %vm382, %v374, %v379
        %v384 = vrsqrt.pop %v322
        %v385 = vmul.f32 %v384, %v322
        %v386 = vmul.f32 %v385, %v384
        %v387 = vmul.f32 0.5, %v386
        %v388 = vsub.f32 1.5, %v387
        %v389 = vmul.f32 %v384, %v388
        %vm390 = vweird.f32 %v322
        %vm391 = vweird.f32 %v384
        %vm392 = vmor %vm390, %vm391
        %v393 = vsel %vm392, %v384, %v389
        %v394 = vrsqrt.pop %v323
        %v395 = vmul.f32 %v394, %v323
        %v396 = vmul.f32 %v395, %v394
        %v397 = vmul.f32 0.5, %v396
        %v398 = vsub.f32 1.5, %v397
        %v399 = vmul.f32 %v394, %v398
        %vm400 = vweird.f32 %v323
        %vm401 = vweird.f32 %v394
        %vm402 = vmor %vm400, %vm401
        %v403 = vsel %vm402, %v394, %v399
        %v404 = vmul.f32 %v276, %v333
        %v405 = vmul.f32 %v277, %v343
        %v406 = vmul.f32 %v278, %v353
        %v407 = vmul.f32 %v279, %v363
        %v408 = vmul.f32 %v280, %v373
        %v409 = vmul.f32 %v281, %v383
        %v410 = vmul.f32 %v282, %v393
        %v411 = vmul.f32 %v283, %v403
        %v412 = vperm.slane %v227, 0
        %v413 = vmul.f32 %v404, %v412
        %v414 = vmul.f32 %v405, %v412
        %v415 = vmul.f32 %v406, %v412
        %v416 = vmul.f32 %v407, %v412
        %v417 = vmul.f32 %v408, %v412
        %v418 = vmul.f32 %v409, %v412
        %v419 = vmul.f32 %v410, %v412
        %v420 = vmul.f32 %v411, %v412
        %v421 = vperm.slane %v227, 1
        %v422 = vadd.f32 %v413, %v421
        %v423 = vadd.f32 %v414, %v421
        %v424 = vadd.f32 %v415, %v421
        %v425 = vadd.f32 %v416, %v421
        %v426 = vadd.f32 %v417, %v421
        %v427 = vadd.f32 %v418, %v421
        %v428 = vadd.f32 %v419, %v421
        %v429 = vadd.f32 %v420, %v421
        %v430 = vpack.c.bf16 %v423, %v422
        %v431 = vpack.c.bf16 %v425, %v424
        %v432 = vpack.c.bf16 %v427, %v426
        %v433 = vpack.c.bf16 %v429, %v428
        %s434 = scalar_lea.vmem [#allocation2], 64
        %v435 = vld [vmem:[%s434] sm:$0xf]
        %v436 = vld [vmem:[%s434 + $0x4] sm:$0xf]
        %v437 = vld [vmem:[%s434 + $0x8] sm:$0xf]
        %v438 = vld [vmem:[%s434 + $0xc] sm:$0xf]
        %v439 = vld [vmem:[%s434 + $0x10] sm:$0xf]
        %v440 = vld [vmem:[%s434 + $0x14] sm:$0xf]
        %v441 = vld [vmem:[%s434 + $0x18] sm:$0xf]
        %v442 = vld [vmem:[%s434 + $0x1c] sm:$0xf]
        %v443 = vld [vmem:[%s434 + $0x20] sm:$0xf]
        %v444 = vld [vmem:[%s434 + $0x24] sm:$0xf]
        %v445 = vld [vmem:[%s434 + $0x28] sm:$0xf]
        %v446 = vld [vmem:[%s434 + $0x2c] sm:$0xf]
        %v447 = vld [vmem:[%s434 + $0x30] sm:$0xf]
        %v448 = vld [vmem:[%s434 + $0x34] sm:$0xf]
        %v449 = vld [vmem:[%s434 + $0x38] sm:$0xf]
        %v450 = vld [vmem:[%s434 + $0x3c] sm:$0xf]
        %v451 = vperm.slane %v227, 3
        %v468 = vunpack.c.l.b16 %v435
        %v469 = vunpack.c.l.b16 %v436
        %v470 = vunpack.c.l.b16 %v437
        %v471 = vunpack.c.l.b16 %v438
        %v472 = vunpack.c.l.b16 %v439
        %v473 = vunpack.c.l.b16 %v440
        %v474 = vunpack.c.l.b16 %v441
        %v475 = vunpack.c.l.b16 %v442
        %v476 = vunpack.c.l.b16 %v443
        %v477 = vunpack.c.l.b16 %v444
        %v478 = vunpack.c.l.b16 %v445
        %v479 = vunpack.c.l.b16 %v446
        %v480 = vunpack.c.l.b16 %v447
        %v481 = vunpack.c.l.b16 %v448
        %v482 = vunpack.c.l.b16 %v449
        %v483 = vunpack.c.l.b16 %v450
        %v484 = vpack.c.b16 %v469, %v468
        %v485 = vpack.c.b16 %v471, %v470
        %v486 = vpack.c.b16 %v473, %v472
        %v487 = vpack.c.b16 %v475, %v474
        %v488 = vpack.c.b16 %v477, %v476
        %v489 = vpack.c.b16 %v479, %v478
        %v490 = vpack.c.b16 %v481, %v480
        %v491 = vpack.c.b16 %v483, %v482
        %500 = vmatpush.bf16.msra.mxu0 %v491
        %501 = vmatpush.bf16.msra.mxu0 %v490
        %502 = vmatpush.bf16.msra.mxu0 %v489
        %503 = vmatpush.bf16.msra.mxu0 %v488
        %504 = vmatpush.bf16.msra.mxu0 %v487
        %505 = vmatpush.bf16.msra.mxu0 %v486
        %506 = vmatpush.bf16.msra.mxu0 %v485
        %507 = vmatpush.bf16.msra.mxu0 %v484
        %508 = vmatmul.bf16.gmra.mxu0 %v430
        %v509 = vpop.f32.mrf.mxu0
        %v510 = vadd.f32 %v451, %v509
        %v511 = vpop.f32.mrf.mxu0
        %v512 = vadd.f32 %v451, %v511
        %513 = vmatmul.bf16.gmra.mxu0 %v431
        %v514 = vpop.f32.mrf.mxu0
        %v515 = vadd.f32 %v451, %v514
        %v516 = vpop.f32.mrf.mxu0
        %v517 = vadd.f32 %v451, %v516
        %518 = vmatmul.bf16.gmra.mxu0 %v432
        %v519 = vpop.f32.mrf.mxu0
        %v520 = vadd.f32 %v451, %v519
        %v521 = vpop.f32.mrf.mxu0
        %v522 = vadd.f32 %v451, %v521
        %523 = vmatmul.bf16.gmra.mxu0 %v433
        %v524 = vpop.f32.mrf.mxu0
        %v525 = vadd.f32 %v451, %v524
        %v526 = vpop.f32.mrf.mxu0
        %v527 = vadd.f32 %v451, %v526
        %528 = vdwg.mxu0
        %s529 = scalar_lea.vmem [#allocation2], 128
        %v530 = vld [vmem:[%s529] sm:$0xf]
        %v531 = vld [vmem:[%s529 + $0x4] sm:$0xf]
        %v532 = vld [vmem:[%s529 + $0x8] sm:$0xf]
        %v533 = vld [vmem:[%s529 + $0xc] sm:$0xf]
        %v534 = vld [vmem:[%s529 + $0x10] sm:$0xf]
        %v535 = vld [vmem:[%s529 + $0x14] sm:$0xf]
        %v536 = vld [vmem:[%s529 + $0x18] sm:$0xf]
        %v537 = vld [vmem:[%s529 + $0x1c] sm:$0xf]
        %v538 = vld [vmem:[%s529 + $0x20] sm:$0xf]
        %v539 = vld [vmem:[%s529 + $0x24] sm:$0xf]
        %v540 = vld [vmem:[%s529 + $0x28] sm:$0xf]
        %v541 = vld [vmem:[%s529 + $0x2c] sm:$0xf]
        %v542 = vld [vmem:[%s529 + $0x30] sm:$0xf]
        %v543 = vld [vmem:[%s529 + $0x34] sm:$0xf]
        %v544 = vld [vmem:[%s529 + $0x38] sm:$0xf]
        %v545 = vld [vmem:[%s529 + $0x3c] sm:$0xf]
        %v546 = vperm.slane %v227, 4
        %v563 = vunpack.c.l.b16 %v530
        %v564 = vunpack.c.l.b16 %v531
        %v565 = vunpack.c.l.b16 %v532
        %v566 = vunpack.c.l.b16 %v533
        %v567 = vunpack.c.l.b16 %v534
        %v568 = vunpack.c.l.b16 %v535
        %v569 = vunpack.c.l.b16 %v536
        %v570 = vunpack.c.l.b16 %v537
        %v571 = vunpack.c.l.b16 %v538
        %v572 = vunpack.c.l.b16 %v539
        %v573 = vunpack.c.l.b16 %v540
        %v574 = vunpack.c.l.b16 %v541
        %v575 = vunpack.c.l.b16 %v542
        %v576 = vunpack.c.l.b16 %v543
        %v577 = vunpack.c.l.b16 %v544
        %v578 = vunpack.c.l.b16 %v545
        %v579 = vpack.c.b16 %v564, %v563
        %v580 = vpack.c.b16 %v566, %v565
        %v581 = vpack.c.b16 %v568, %v567
        %v582 = vpack.c.b16 %v570, %v569
        %v583 = vpack.c.b16 %v572, %v571
        %v584 = vpack.c.b16 %v574, %v573
        %v585 = vpack.c.b16 %v576, %v575
        %v586 = vpack.c.b16 %v578, %v577
        %595 = vmatpush.bf16.msra.mxu0 %v586
        %596 = vmatpush.bf16.msra.mxu0 %v585
        %597 = vmatpush.bf16.msra.mxu0 %v584
        %598 = vmatpush.bf16.msra.mxu0 %v583
        %599 = vmatpush.bf16.msra.mxu0 %v582
        %600 = vmatpush.bf16.msra.mxu0 %v581
        %601 = vmatpush.bf16.msra.mxu0 %v580
        %602 = vmatpush.bf16.msra.mxu0 %v579
        %603 = vmatmul.bf16.gmra.mxu0 %v430
        %v604 = vpop.f32.mrf.mxu0
        %v605 = vadd.f32 %v546, %v604
        %v606 = vpop.f32.mrf.mxu0
        %v607 = vadd.f32 %v546, %v606
        %608 = vmatmul.bf16.gmra.mxu0 %v431
        %v609 = vpop.f32.mrf.mxu0
        %v610 = vadd.f32 %v546, %v609
        %v611 = vpop.f32.mrf.mxu0
        %v612 = vadd.f32 %v546, %v611
        %613 = vmatmul.bf16.gmra.mxu0 %v432
        %v614 = vpop.f32.mrf.mxu0
        %v615 = vadd.f32 %v546, %v614
        %v616 = vpop.f32.mrf.mxu0
        %v617 = vadd.f32 %v546, %v616
        %618 = vmatmul.bf16.gmra.mxu0 %v433
        %v619 = vpop.f32.mrf.mxu0
        %v620 = vadd.f32 %v546, %v619
        %v621 = vpop.f32.mrf.mxu0
        %v622 = vadd.f32 %v546, %v621
        %623 = vdwg.mxu0
        %v624 = vpack.c.bf16 %v422, %v422
        %v625 = vpack.c.bf16 %v423, %v423
        %v626 = vpack.c.bf16 %v424, %v424
        %v627 = vpack.c.bf16 %v425, %v425
        %v628 = vpack.c.bf16 %v426, %v426
        %v629 = vpack.c.bf16 %v427, %v427
        %v630 = vpack.c.bf16 %v428, %v428
        %v631 = vpack.c.bf16 %v429, %v429
        %v632 = vld [vmem:[#allocation2] sm:$0xf]
        %v633 = vld [vmem:[#allocation2 + $0x4] sm:$0xf]
        %v634 = vld [vmem:[#allocation2 + $0x8] sm:$0xf]
        %v635 = vld [vmem:[#allocation2 + $0xc] sm:$0xf]
        %v636 = vld [vmem:[#allocation2 + $0x10] sm:$0xf]
        %v637 = vld [vmem:[#allocation2 + $0x14] sm:$0xf]
        %v638 = vld [vmem:[#allocation2 + $0x18] sm:$0xf]
        %v639 = vld [vmem:[#allocation2 + $0x1c] sm:$0xf]
        %v640 = vld [vmem:[#allocation2 + $0x20] sm:$0xf]
        %v641 = vld [vmem:[#allocation2 + $0x24] sm:$0xf]
        %v642 = vld [vmem:[#allocation2 + $0x28] sm:$0xf]
        %v643 = vld [vmem:[#allocation2 + $0x2c] sm:$0xf]
        %v644 = vld [vmem:[#allocation2 + $0x30] sm:$0xf]
        %v645 = vld [vmem:[#allocation2 + $0x34] sm:$0xf]
        %v646 = vld [vmem:[#allocation2 + $0x38] sm:$0xf]
        %v647 = vld [vmem:[#allocation2 + $0x3c] sm:$0xf]
        %v648 = vperm.slane %v227, 2
        %v657 = vunpack.c.l.b16 %v624
        %v658 = vunpack.c.l.b16 %v625
        %v659 = vunpack.c.l.b16 %v626
        %v660 = vunpack.c.l.b16 %v627
        %v661 = vunpack.c.l.b16 %v628
        %v662 = vunpack.c.l.b16 %v629
        %v663 = vunpack.c.l.b16 %v630
        %v664 = vunpack.c.l.b16 %v631
        %v665 = vrot.slane %v657, 4
        %v666 = vrot.slane %v658, 3
        %vm667 = vcmask 1041409
        %v668 = vsel %vm667, %v666, %v665
        %v669 = vrot.slane %v659, 2
        %vm670 = vcmask 1042434
        %v671 = vsel %vm670, %v669, %v668
        %v672 = vrot.slane %v660, 1
        %vm673 = vcmask 1043459
        %v674 = vsel %vm673, %v672, %v671
        %vm675 = vcmask 1044484
        %v676 = vsel %vm675, %v661, %v674
        %v677 = vrot.slane %v662, 7
        %vm678 = vcmask 1045509
        %v679 = vsel %vm678, %v677, %v676
        %v680 = vrot.slane %v663, 6
        %vm681 = vcmask 1046534
        %v682 = vsel %vm681, %v680, %v679
        %v683 = vrot.slane %v664, 5
        %vm684 = vcmask 1047559
        %v685 = vsel %vm684, %v683, %v682
        %v686 = vpack.c.b16 %v685, %v685
        %v704 = vunpack.c.l.b16 %v632
        %v705 = vunpack.c.l.b16 %v633
        %v706 = vunpack.c.l.b16 %v634
        %v707 = vunpack.c.l.b16 %v635
        %v708 = vunpack.c.l.b16 %v636
        %v709 = vunpack.c.l.b16 %v637
        %v710 = vunpack.c.l.b16 %v638
        %v711 = vunpack.c.l.b16 %v639
        %v712 = vunpack.c.l.b16 %v640
        %v713 = vunpack.c.l.b16 %v641
        %v714 = vunpack.c.l.b16 %v642
        %v715 = vunpack.c.l.b16 %v643
        %v716 = vunpack.c.l.b16 %v644
        %v717 = vunpack.c.l.b16 %v645
        %v718 = vunpack.c.l.b16 %v646
        %v719 = vunpack.c.l.b16 %v647
        %v720 = vpack.c.b16 %v705, %v704
        %v721 = vpack.c.b16 %v707, %v706
        %v722 = vpack.c.b16 %v709, %v708
        %v723 = vpack.c.b16 %v711, %v710
        %v724 = vpack.c.b16 %v713, %v712
        %v725 = vpack.c.b16 %v715, %v714
        %v726 = vpack.c.b16 %v717, %v716
        %v727 = vpack.c.b16 %v719, %v718
        %736 = vmatpush.bf16.msra.mxu0 %v727
        %737 = vmatpush.bf16.msra.mxu0 %v726
        %738 = vmatpush.bf16.msra.mxu0 %v725
        %739 = vmatpush.bf16.msra.mxu0 %v724
        %740 = vmatpush.bf16.msra.mxu0 %v723
        %741 = vmatpush.bf16.msra.mxu0 %v722
        %742 = vmatpush.bf16.msra.mxu0 %v721
        %743 = vmatpush.bf16.msra.mxu0 %v720
        %744 = vmatmul.bf16.gmra.mxu0 %v686
        %v745 = vpop.f32.mrf.mxu0
        %v746 = vadd.f32 %v648, %v745
        %v747 = vpop.f32.mrf.mxu0
        %748 = vdwg.mxu0
        %v750 = vrot.slane %v746, 1
        %v751 = vrot.slane %v746, 2
        %v752 = vrot.slane %v746, 3
        %v753 = vrot.slane %v746, 4
        %v754 = vrot.slane %v746, 5
        %v755 = vrot.slane %v746, 6
        %v756 = vrot.slane %v746, 7
        %v757 = vperm.slane %v746, 0
        %v758 = vperm.slane %v750, 0
        %v759 = vperm.slane %v751, 0
        %v760 = vperm.slane %v752, 0
        %v761 = vperm.slane %v753, 0
        %v762 = vperm.slane %v754, 0
        %v763 = vperm.slane %v755, 0
        %v764 = vperm.slane %v756, 0
        %v773 = vmul.f32 %v757, %v510
        %v774 = vmul.f32 %v758, %v512
        %v775 = vmul.f32 %v759, %v515
        %v776 = vmul.f32 %v760, %v517
        %v777 = vmul.f32 %v761, %v520
        %v778 = vmul.f32 %v762, %v522
        %v779 = vmul.f32 %v763, %v525
        %v780 = vmul.f32 %v764, %v527
        %781 = vmatpush.msra.mxu0 %v244
        %782 = vmatpush.msra.mxu0 %v243
        %783 = vmatpush.msra.mxu0 %v242
        %784 = vmatpush.msra.mxu0 %v241
        %785 = vmatpush.msra.mxu0 %v240
        %786 = vmatpush.msra.mxu0 %v239
        %787 = vmatpush.msra.mxu0 %v238
        %788 = vmatpush.msra.mxu0 %v237
        %789 = vmatpush.msra.mxu0 %v236
        %790 = vmatpush.msra.mxu0 %v235
        %791 = vmatpush.msra.mxu0 %v234
        %792 = vmatpush.msra.mxu0 %v233
        %793 = vmatpush.msra.mxu0 %v232
        %794 = vmatpush.msra.mxu0 %v231
        %795 = vmatpush.msra.mxu0 %v230
        %796 = vmatpush.msra.mxu0 %v229
        %797 = vmatmul.f32.gmra.mxu0 %v773
        %v798 = vpop.f32.mrf.mxu0
        %v799 = vadd.f32 0.0, %v798
        %800 = vmatmul.f32.gmra.mxu0 %v774
        %v801 = vpop.f32.mrf.mxu0
        %v802 = vadd.f32 0.0, %v801
        %803 = vmatmul.f32.gmra.mxu0 %v775
        %v804 = vpop.f32.mrf.mxu0
        %v805 = vadd.f32 0.0, %v804
        %806 = vmatmul.f32.gmra.mxu0 %v776
        %v807 = vpop.f32.mrf.mxu0
        %v808 = vadd.f32 0.0, %v807
        %809 = vmatmul.f32.gmra.mxu0 %v777
        %v810 = vpop.f32.mrf.mxu0
        %v811 = vadd.f32 0.0, %v810
        %812 = vmatmul.f32.gmra.mxu0 %v778
        %v813 = vpop.f32.mrf.mxu0
        %v814 = vadd.f32 0.0, %v813
        %815 = vmatmul.f32.gmra.mxu0 %v779
        %v816 = vpop.f32.mrf.mxu0
        %v817 = vadd.f32 0.0, %v816
        %818 = vmatmul.f32.gmra.mxu0 %v780
        %v819 = vpop.f32.mrf.mxu0
        %v820 = vadd.f32 0.0, %v819
        %821 = vdwg.mxu0
        %v822 = vmul.f32 %v799, 0.17677669
        %v823 = vmul.f32 %v802, 0.17677669
        %v824 = vmul.f32 %v805, 0.17677669
        %v825 = vmul.f32 %v808, 0.17677669
        %v826 = vmul.f32 %v811, 0.17677669
        %v827 = vmul.f32 %v814, 0.17677669
        %v828 = vmul.f32 %v817, 0.17677669
        %v829 = vmul.f32 %v820, 0.17677669
        %v830 = vrot.slane %v822, 4
        %v831 = vmax.f32 %v822, %v830
        %v832 = vrot.slane %v831, 2
        %v833 = vmax.f32 %v831, %v832
        %v834 = vrot.slane %v833, 1
        %v835 = vmax.f32 %v833, %v834
        %v836 = vrot.slane %v823, 4
        %v837 = vmax.f32 %v823, %v836
        %v838 = vrot.slane %v837, 2
        %v839 = vmax.f32 %v837, %v838
        %v840 = vrot.slane %v839, 1
        %v841 = vmax.f32 %v839, %v840
        %v842 = vrot.slane %v824, 4
        %v843 = vmax.f32 %v824, %v842
        %v844 = vrot.slane %v843, 2
        %v845 = vmax.f32 %v843, %v844
        %v846 = vrot.slane %v845, 1
        %v847 = vmax.f32 %v845, %v846
        %v848 = vrot.slane %v825, 4
        %v849 = vmax.f32 %v825, %v848
        %v850 = vrot.slane %v849, 2
        %v851 = vmax.f32 %v849, %v850
        %v852 = vrot.slane %v851, 1
        %v853 = vmax.f32 %v851, %v852
        %v854 = vrot.slane %v826, 4
        %v855 = vmax.f32 %v826, %v854
        %v856 = vrot.slane %v855, 2
        %v857 = vmax.f32 %v855, %v856
        %v858 = vrot.slane %v857, 1
        %v859 = vmax.f32 %v857, %v858
        %v860 = vrot.slane %v827, 4
        %v861 = vmax.f32 %v827, %v860
        %v862 = vrot.slane %v861, 2
        %v863 = vmax.f32 %v861, %v862
        %v864 = vrot.slane %v863, 1
        %v865 = vmax.f32 %v863, %v864
        %v866 = vrot.slane %v828, 4
        %v867 = vmax.f32 %v828, %v866
        %v868 = vrot.slane %v867, 2
        %v869 = vmax.f32 %v867, %v868
        %v870 = vrot.slane %v869, 1
        %v871 = vmax.f32 %v869, %v870
        %v872 = vrot.slane %v829, 4
        %v873 = vmax.f32 %v829, %v872
        %v874 = vrot.slane %v873, 2
        %v875 = vmax.f32 %v873, %v874
        %v876 = vrot.slane %v875, 1
        %v877 = vmax.f32 %v875, %v876
        %v878 = vsub.f32 %v822, %v835
        %v879 = vsub.f32 %v823, %v841
        %v880 = vsub.f32 %v824, %v847
        %v881 = vsub.f32 %v825, %v853
        %v882 = vsub.f32 %v826, %v859
        %v883 = vsub.f32 %v827, %v865
        %v884 = vsub.f32 %v828, %v871
        %v885 = vsub.f32 %v829, %v877
        %v886 = vmul.f32 %v878, 1.442695
        %v887 = vpow.pop %v886
        %v888 = vmul.f32 %v879, 1.442695
        %v889 = vpow.pop %v888
        %v890 = vmul.f32 %v880, 1.442695
        %v891 = vpow.pop %v890
        %v892 = vmul.f32 %v881, 1.442695
        %v893 = vpow.pop %v892
        %v894 = vmul.f32 %v882, 1.442695
        %v895 = vpow.pop %v894
        %v896 = vmul.f32 %v883, 1.442695
        %v897 = vpow.pop %v896
        %v898 = vmul.f32 %v884, 1.442695
        %v899 = vpow.pop %v898
        %v900 = vmul.f32 %v885, 1.442695
        %v901 = vpow.pop %v900
        %v902 = vrot.slane %v887, 4
        %v903 = vadd.f32 %v887, %v902
        %v904 = vrot.slane %v903, 2
        %v905 = vadd.f32 %v903, %v904
        %v906 = vrot.slane %v905, 1
        %v907 = vadd.f32 %v905, %v906
        %v908 = vrot.slane %v889, 4
        %v909 = vadd.f32 %v889, %v908
        %v910 = vrot.slane %v909, 2
        %v911 = vadd.f32 %v909, %v910
        %v912 = vrot.slane %v911, 1
        %v913 = vadd.f32 %v911, %v912
        %v914 = vrot.slane %v891, 4
        %v915 = vadd.f32 %v891, %v914
        %v916 = vrot.slane %v915, 2
        %v917 = vadd.f32 %v915, %v916
        %v918 = vrot.slane %v917, 1
        %v919 = vadd.f32 %v917, %v918
        %v920 = vrot.slane %v893, 4
        %v921 = vadd.f32 %v893, %v920
        %v922 = vrot.slane %v921, 2
        %v923 = vadd.f32 %v921, %v922
        %v924 = vrot.slane %v923, 1
        %v925 = vadd.f32 %v923, %v924
        %v926 = vrot.slane %v895, 4
        %v927 = vadd.f32 %v895, %v926
        %v928 = vrot.slane %v927, 2
        %v929 = vadd.f32 %v927, %v928
        %v930 = vrot.slane %v929, 1
        %v931 = vadd.f32 %v929, %v930
        %v932 = vrot.slane %v897, 4
        %v933 = vadd.f32 %v897, %v932
        %v934 = vrot.slane %v933, 2
        %v935 = vadd.f32 %v933, %v934
        %v936 = vrot.slane %v935, 1
        %v937 = vadd.f32 %v935, %v936
        %v938 = vrot.slane %v899, 4
        %v939 = vadd.f32 %v899, %v938
        %v940 = vrot.slane %v939, 2
        %v941 = vadd.f32 %v939, %v940
        %v942 = vrot.slane %v941, 1
        %v943 = vadd.f32 %v941, %v942
        %v944 = vrot.slane %v901, 4
        %v945 = vadd.f32 %v901, %v944
        %v946 = vrot.slane %v945, 2
        %v947 = vadd.f32 %v945, %v946
        %v948 = vrot.slane %v947, 1
        %v949 = vadd.f32 %v947, %v948
        %v950 = vrcp.pop %v907
        %v951 = vmul.f32 %v907, %v950
        %v952 = vsub.f32 1.0, %v951
        %v953 = vmul.f32 %v950, %v952
        %v954 = vadd.f32 %v950, %v953
        %vm955 = vweird.f32 %v907
        %vm956 = vweird.f32 %v950
        %vm957 = vmor %vm955, %vm956
        %v958 = vsel %vm957, %v950, %v954
        %v959 = vand.u32 2147483647, %v907
        %vm960 = vcmp.eq.f32.partialorder %v959, 8.507059e+37
        %v961 = vand.u32 %v907, 2147483648
        %v962 = vor.u32 1.1754944e-38, %v961
        %v963 = vsel %vm960, %v962, %v958
        %v964 = vmul.f32 %v887, %v963
        %v965 = vrcp.pop %v913
        %v966 = vmul.f32 %v913, %v965
        %v967 = vsub.f32 1.0, %v966
        %v968 = vmul.f32 %v965, %v967
        %v969 = vadd.f32 %v965, %v968
        %vm970 = vweird.f32 %v913
        %vm971 = vweird.f32 %v965
        %vm972 = vmor %vm970, %vm971
        %v973 = vsel %vm972, %v965, %v969
        %v974 = vand.u32 2147483647, %v913
        %vm975 = vcmp.eq.f32.partialorder %v974, 8.507059e+37
        %v976 = vand.u32 %v913, 2147483648
        %v977 = vor.u32 1.1754944e-38, %v976
        %v978 = vsel %vm975, %v977, %v973
        %v979 = vmul.f32 %v889, %v978
        %v980 = vrcp.pop %v919
        %v981 = vmul.f32 %v919, %v980
        %v982 = vsub.f32 1.0, %v981
        %v983 = vmul.f32 %v980, %v982
        %v984 = vadd.f32 %v980, %v983
        %vm985 = vweird.f32 %v919
        %vm986 = vweird.f32 %v980
        %vm987 = vmor %vm985, %vm986
        %v988 = vsel %vm987, %v980, %v984
        %v989 = vand.u32 2147483647, %v919
        %vm990 = vcmp.eq.f32.partialorder %v989, 8.507059e+37
        %v991 = vand.u32 %v919, 2147483648
        %v992 = vor.u32 1.1754944e-38, %v991
        %v993 = vsel %vm990, %v992, %v988
        %v994 = vmul.f32 %v891, %v993
        %v995 = vrcp.pop %v925
        %v996 = vmul.f32 %v925, %v995
        %v997 = vsub.f32 1.0, %v996
        %v998 = vmul.f32 %v995, %v997
        %v999 = vadd.f32 %v995, %v998
        %vm1000 = vweird.f32 %v925
        %vm1001 = vweird.f32 %v995
        %vm1002 = vmor %vm1000, %vm1001
        %v1003 = vsel %vm1002, %v995, %v999
        %v1004 = vand.u32 2147483647, %v925
        %vm1005 = vcmp.eq.f32.partialorder %v1004, 8.507059e+37
        %v1006 = vand.u32 %v925, 2147483648
        %v1007 = vor.u32 1.1754944e-38, %v1006
        %v1008 = vsel %vm1005, %v1007, %v1003
        %v1009 = vmul.f32 %v893, %v1008
        %v1010 = vrcp.pop %v931
        %v1011 = vmul.f32 %v931, %v1010
        %v1012 = vsub.f32 1.0, %v1011
        %v1013 = vmul.f32 %v1010, %v1012
        %v1014 = vadd.f32 %v1010, %v1013
        %vm1015 = vweird.f32 %v931
        %vm1016 = vweird.f32 %v1010
        %vm1017 = vmor %vm1015, %vm1016
        %v1018 = vsel %vm1017, %v1010, %v1014
        %v1019 = vand.u32 2147483647, %v931
        %vm1020 = vcmp.eq.f32.partialorder %v1019, 8.507059e+37
        %v1021 = vand.u32 %v931, 2147483648
        %v1022 = vor.u32 1.1754944e-38, %v1021
        %v1023 = vsel %vm1020, %v1022, %v1018
        %v1024 = vmul.f32 %v895, %v1023
        %v1025 = vrcp.pop %v937
        %v1026 = vmul.f32 %v937, %v1025
        %v1027 = vsub.f32 1.0, %v1026
        %v1028 = vmul.f32 %v1025, %v1027
        %v1029 = vadd.f32 %v1025, %v1028
        %vm1030 = vweird.f32 %v937
        %vm1031 = vweird.f32 %v1025
        %vm1032 = vmor %vm1030, %vm1031
        %v1033 = vsel %vm1032, %v1025, %v1029
        %v1034 = vand.u32 2147483647, %v937
        %vm1035 = vcmp.eq.f32.partialorder %v1034, 8.507059e+37
        %v1036 = vand.u32 %v937, 2147483648
        %v1037 = vor.u32 1.1754944e-38, %v1036
        %v1038 = vsel %vm1035, %v1037, %v1033
        %v1039 = vmul.f32 %v897, %v1038
        %v1040 = vrcp.pop %v943
        %v1041 = vmul.f32 %v943, %v1040
        %v1042 = vsub.f32 1.0, %v1041
        %v1043 = vmul.f32 %v1040, %v1042
        %v1044 = vadd.f32 %v1040, %v1043
        %vm1045 = vweird.f32 %v943
        %vm1046 = vweird.f32 %v1040
        %vm1047 = vmor %vm1045, %vm1046
        %v1048 = vsel %vm1047, %v1040, %v1044
        %v1049 = vand.u32 2147483647, %v943
        %vm1050 = vcmp.eq.f32.partialorder %v1049, 8.507059e+37
        %v1051 = vand.u32 %v943, 2147483648
        %v1052 = vor.u32 1.1754944e-38, %v1051
        %v1053 = vsel %vm1050, %v1052, %v1048
        %v1054 = vmul.f32 %v899, %v1053
        %v1055 = vrcp.pop %v949
        %v1056 = vmul.f32 %v949, %v1055
        %v1057 = vsub.f32 1.0, %v1056
        %v1058 = vmul.f32 %v1055, %v1057
        %v1059 = vadd.f32 %v1055, %v1058
        %vm1060 = vweird.f32 %v949
        %vm1061 = vweird.f32 %v1055
        %vm1062 = vmor %vm1060, %vm1061
        %v1063 = vsel %vm1062, %v1055, %v1059
        %v1064 = vand.u32 2147483647, %v949
        %vm1065 = vcmp.eq.f32.partialorder %v1064, 8.507059e+37
        %v1066 = vand.u32 %v949, 2147483648
        %v1067 = vor.u32 1.1754944e-38, %v1066
        %v1068 = vsel %vm1065, %v1067, %v1063
        %v1069 = vmul.f32 %v901, %v1068
        %v1070 = vmul.f32 %v964, %v605
        %v1071 = vmul.f32 %v979, %v607
        %v1072 = vmul.f32 %v994, %v610
        %v1073 = vmul.f32 %v1009, %v612
        %v1074 = vmul.f32 %v1024, %v615
        %v1075 = vmul.f32 %v1039, %v617
        %v1076 = vmul.f32 %v1054, %v620
        %v1077 = vmul.f32 %v1069, %v622
        %v1078 = vrot.slane %v1070, 4
        %v1079 = vadd.f32 %v1070, %v1078
        %v1080 = vrot.slane %v1079, 2
        %v1081 = vadd.f32 %v1079, %v1080
        %v1082 = vrot.slane %v1081, 1
        %v1083 = vadd.f32 %v1081, %v1082
        %v1084 = vrot.slane %v1071, 4
        %v1085 = vadd.f32 %v1071, %v1084
        %v1086 = vrot.slane %v1085, 2
        %v1087 = vadd.f32 %v1085, %v1086
        %v1088 = vrot.slane %v1087, 1
        %v1089 = vadd.f32 %v1087, %v1088
        %v1090 = vrot.slane %v1072, 4
        %v1091 = vadd.f32 %v1072, %v1090
        %v1092 = vrot.slane %v1091, 2
        %v1093 = vadd.f32 %v1091, %v1092
        %v1094 = vrot.slane %v1093, 1
        %v1095 = vadd.f32 %v1093, %v1094
        %v1096 = vrot.slane %v1073, 4
        %v1097 = vadd.f32 %v1073, %v1096
        %v1098 = vrot.slane %v1097, 2
        %v1099 = vadd.f32 %v1097, %v1098
        %v1100 = vrot.slane %v1099, 1
        %v1101 = vadd.f32 %v1099, %v1100
        %v1102 = vrot.slane %v1074, 4
        %v1103 = vadd.f32 %v1074, %v1102
        %v1104 = vrot.slane %v1103, 2
        %v1105 = vadd.f32 %v1103, %v1104
        %v1106 = vrot.slane %v1105, 1
        %v1107 = vadd.f32 %v1105, %v1106
        %v1108 = vrot.slane %v1075, 4
        %v1109 = vadd.f32 %v1075, %v1108
        %v1110 = vrot.slane %v1109, 2
        %v1111 = vadd.f32 %v1109, %v1110
        %v1112 = vrot.slane %v1111, 1
        %v1113 = vadd.f32 %v1111, %v1112
        %v1114 = vrot.slane %v1076, 4
        %v1115 = vadd.f32 %v1076, %v1114
        %v1116 = vrot.slane %v1115, 2
        %v1117 = vadd.f32 %v1115, %v1116
        %v1118 = vrot.slane %v1117, 1
        %v1119 = vadd.f32 %v1117, %v1118
        %v1120 = vrot.slane %v1077, 4
        %v1121 = vadd.f32 %v1077, %v1120
        %v1122 = vrot.slane %v1121, 2
        %v1123 = vadd.f32 %v1121, %v1122
        %v1124 = vrot.slane %v1123, 1
        %v1125 = vadd.f32 %v1123, %v1124
        %v1126 = vpack.c.bf16 %v1083, %v1083
        %v1127 = vpack.c.bf16 %v1089, %v1089
        %v1128 = vpack.c.bf16 %v1095, %v1095
        %v1129 = vpack.c.bf16 %v1101, %v1101
        %v1130 = vpack.c.bf16 %v1107, %v1107
        %v1131 = vpack.c.bf16 %v1113, %v1113
        %v1132 = vpack.c.bf16 %v1119, %v1119
        %v1133 = vpack.c.bf16 %v1125, %v1125
        %s1134 = scalar_lea.vmem [#allocation2], 192
        %v1135 = vld [vmem:[%s1134] sm:$0xf]
        %v1136 = vld [vmem:[%s1134 + $0x4] sm:$0xf]
        %v1137 = vld [vmem:[%s1134 + $0x8] sm:$0xf]
        %v1138 = vld [vmem:[%s1134 + $0xc] sm:$0xf]
        %v1139 = vld [vmem:[%s1134 + $0x10] sm:$0xf]
        %v1140 = vld [vmem:[%s1134 + $0x14] sm:$0xf]
        %v1141 = vld [vmem:[%s1134 + $0x18] sm:$0xf]
        %v1142 = vld [vmem:[%s1134 + $0x1c] sm:$0xf]
        %v1143 = vld [vmem:[%s1134 + $0x20] sm:$0xf]
        %v1144 = vld [vmem:[%s1134 + $0x24] sm:$0xf]
        %v1145 = vld [vmem:[%s1134 + $0x28] sm:$0xf]
        %v1146 = vld [vmem:[%s1134 + $0x2c] sm:$0xf]
        %v1147 = vld [vmem:[%s1134 + $0x30] sm:$0xf]
        %v1148 = vld [vmem:[%s1134 + $0x34] sm:$0xf]
        %v1149 = vld [vmem:[%s1134 + $0x38] sm:$0xf]
        %v1150 = vld [vmem:[%s1134 + $0x3c] sm:$0xf]
        %v1151 = vperm.slane %v227, 5
        %v1160 = vunpack.c.l.b16 %v1126
        %v1161 = vunpack.c.l.b16 %v1127
        %v1162 = vunpack.c.l.b16 %v1128
        %v1163 = vunpack.c.l.b16 %v1129
        %v1164 = vunpack.c.l.b16 %v1130
        %v1165 = vunpack.c.l.b16 %v1131
        %v1166 = vunpack.c.l.b16 %v1132
        %v1167 = vunpack.c.l.b16 %v1133
        %v1168 = vsel %vm667, %v1161, %v1160
        %v1169 = vsel %vm670, %v1162, %v1168
        %v1170 = vsel %vm673, %v1163, %v1169
        %v1171 = vsel %vm675, %v1164, %v1170
        %v1172 = vsel %vm678, %v1165, %v1171
        %v1173 = vsel %vm681, %v1166, %v1172
        %v1174 = vsel %vm684, %v1167, %v1173
        %v1175 = vpack.c.b16 %v1174, %v1174
        %v1193 = vunpack.c.l.b16 %v1135
        %v1194 = vunpack.c.l.b16 %v1136
        %v1195 = vunpack.c.l.b16 %v1137
        %v1196 = vunpack.c.l.b16 %v1138
        %v1197 = vunpack.c.l.b16 %v1139
        %v1198 = vunpack.c.l.b16 %v1140
        %v1199 = vunpack.c.l.b16 %v1141
        %v1200 = vunpack.c.l.b16 %v1142
        %v1201 = vunpack.c.l.b16 %v1143
        %v1202 = vunpack.c.l.b16 %v1144
        %v1203 = vunpack.c.l.b16 %v1145
        %v1204 = vunpack.c.l.b16 %v1146
        %v1205 = vunpack.c.l.b16 %v1147
        %v1206 = vunpack.c.l.b16 %v1148
        %v1207 = vunpack.c.l.b16 %v1149
        %v1208 = vunpack.c.l.b16 %v1150
        %v1209 = vpack.c.b16 %v1194, %v1193
        %v1210 = vpack.c.b16 %v1196, %v1195
        %v1211 = vpack.c.b16 %v1198, %v1197
        %v1212 = vpack.c.b16 %v1200, %v1199
        %v1213 = vpack.c.b16 %v1202, %v1201
        %v1214 = vpack.c.b16 %v1204, %v1203
        %v1215 = vpack.c.b16 %v1206, %v1205
        %v1216 = vpack.c.b16 %v1208, %v1207
        %1225 = vmatpush.bf16.msra.mxu0 %v1216
        %1226 = vmatpush.bf16.msra.mxu0 %v1215
        %1227 = vmatpush.bf16.msra.mxu0 %v1214
        %1228 = vmatpush.bf16.msra.mxu0 %v1213
        %1229 = vmatpush.bf16.msra.mxu0 %v1212
        %1230 = vmatpush.bf16.msra.mxu0 %v1211
        %1231 = vmatpush.bf16.msra.mxu0 %v1210
        %1232 = vmatpush.bf16.msra.mxu0 %v1209
        %1233 = vmatmul.bf16.gmra.mxu0 %v1175
        %v1234 = vpop.f32.mrf.mxu0
        %v1235 = vadd.f32 %v1151, %v1234
        %v1236 = vpop.f32.mrf.mxu0
        %1237 = vdwg.mxu0
        %v1246 = vrot.slane %v219, 4
        %v1247 = vrot.slane %v220, 3
        %v1248 = vsel %vm667, %v1247, %v1246
        %v1249 = vrot.slane %v221, 2
        %v1250 = vsel %vm670, %v1249, %v1248
        %v1251 = vrot.slane %v222, 1
        %v1252 = vsel %vm673, %v1251, %v1250
        %v1253 = vsel %vm675, %v223, %v1252
        %v1254 = vrot.slane %v224, 7
        %v1255 = vsel %vm678, %v1254, %v1253
        %v1256 = vrot.slane %v225, 6
        %v1257 = vsel %vm681, %v1256, %v1255
        %v1258 = vrot.slane %v226, 5
        %v1259 = vsel %vm684, %v1258, %v1257
        %v1261 = vadd.f32 %v1235, %v1259
        %v1262 = vpack.c.bf16 %v1261, %v1261
        %s1263 = scalar_lea.vmem [#allocation2], 256
        %v1264 = vld [vmem:[%s1263] sm:$0xf]
        %v1265 = vld [vmem:[%s1263 + $0x4] sm:$0xf]
        %v1266 = vld [vmem:[%s1263 + $0x8] sm:$0xf]
        %v1267 = vld [vmem:[%s1263 + $0xc] sm:$0xf]
        %v1268 = vld [vmem:[%s1263 + $0x10] sm:$0xf]
        %v1269 = vld [vmem:[%s1263 + $0x14] sm:$0xf]
        %v1270 = vld [vmem:[%s1263 + $0x18] sm:$0xf]
        %v1271 = vld [vmem:[%s1263 + $0x1c] sm:$0xf]
        %v1272 = vld [vmem:[%s1263 + $0x20] sm:$0xf]
        %v1273 = vld [vmem:[%s1263 + $0x24] sm:$0xf]
        %v1274 = vld [vmem:[%s1263 + $0x28] sm:$0xf]
        %v1275 = vld [vmem:[%s1263 + $0x2c] sm:$0xf]
        %v1276 = vld [vmem:[%s1263 + $0x30] sm:$0xf]
        %v1277 = vld [vmem:[%s1263 + $0x34] sm:$0xf]
        %v1278 = vld [vmem:[%s1263 + $0x38] sm:$0xf]
        %v1279 = vld [vmem:[%s1263 + $0x3c] sm:$0xf]
        %v1280 = vperm.slane %v227, 6
        %v1297 = vunpack.c.l.b16 %v1264
        %v1298 = vunpack.c.l.b16 %v1265
        %v1299 = vunpack.c.l.b16 %v1266
        %v1300 = vunpack.c.l.b16 %v1267
        %v1301 = vunpack.c.l.b16 %v1268
        %v1302 = vunpack.c.l.b16 %v1269
        %v1303 = vunpack.c.l.b16 %v1270
        %v1304 = vunpack.c.l.b16 %v1271
        %v1305 = vunpack.c.l.b16 %v1272
        %v1306 = vunpack.c.l.b16 %v1273
        %v1307 = vunpack.c.l.b16 %v1274
        %v1308 = vunpack.c.l.b16 %v1275
        %v1309 = vunpack.c.l.b16 %v1276
        %v1310 = vunpack.c.l.b16 %v1277
        %v1311 = vunpack.c.l.b16 %v1278
        %v1312 = vunpack.c.l.b16 %v1279
        %v1313 = vpack.c.b16 %v1298, %v1297
        %v1314 = vpack.c.b16 %v1300, %v1299
        %v1315 = vpack.c.b16 %v1302, %v1301
        %v1316 = vpack.c.b16 %v1304, %v1303
        %v1317 = vpack.c.b16 %v1306, %v1305
        %v1318 = vpack.c.b16 %v1308, %v1307
        %v1319 = vpack.c.b16 %v1310, %v1309
        %v1320 = vpack.c.b16 %v1312, %v1311
        %1329 = vmatpush.bf16.msra.mxu0 %v1320
        %1330 = vmatpush.bf16.msra.mxu0 %v1319
        %1331 = vmatpush.bf16.msra.mxu0 %v1318
        %1332 = vmatpush.bf16.msra.mxu0 %v1317
        %1333 = vmatpush.bf16.msra.mxu0 %v1316
        %1334 = vmatpush.bf16.msra.mxu0 %v1315
        %1335 = vmatpush.bf16.msra.mxu0 %v1314
        %1336 = vmatpush.bf16.msra.mxu0 %v1313
        %1337 = vmatmul.bf16.gmra.mxu0 %v1262
        %v1338 = vpop.f32.mrf.mxu0
        %v1339 = vadd.f32 %v1280, %v1338
        %v1340 = vpop.f32.mrf.mxu0
        %1341 = vdwg.mxu0
        %s1342 = scalar_lea.vmem [#allocation2], 320
        %v1343 = vld [vmem:[%s1342] sm:$0xf]
        %v1344 = vld [vmem:[%s1342 + $0x4] sm:$0xf]
        %v1345 = vld [vmem:[%s1342 + $0x8] sm:$0xf]
        %v1346 = vld [vmem:[%s1342 + $0xc] sm:$0xf]
        %v1347 = vld [vmem:[%s1342 + $0x10] sm:$0xf]
        %v1348 = vld [vmem:[%s1342 + $0x14] sm:$0xf]
        %v1349 = vld [vmem:[%s1342 + $0x18] sm:$0xf]
        %v1350 = vld [vmem:[%s1342 + $0x1c] sm:$0xf]
        %v1351 = vld [vmem:[%s1342 + $0x20] sm:$0xf]
        %v1352 = vld [vmem:[%s1342 + $0x24] sm:$0xf]
        %v1353 = vld [vmem:[%s1342 + $0x28] sm:$0xf]
        %v1354 = vld [vmem:[%s1342 + $0x2c] sm:$0xf]
        %v1355 = vld [vmem:[%s1342 + $0x30] sm:$0xf]
        %v1356 = vld [vmem:[%s1342 + $0x34] sm:$0xf]
        %v1357 = vld [vmem:[%s1342 + $0x38] sm:$0xf]
        %v1358 = vld [vmem:[%s1342 + $0x3c] sm:$0xf]
        %v1359 = vperm.slane %v227, 7
        %v1376 = vunpack.c.l.b16 %v1343
        %v1377 = vunpack.c.l.b16 %v1344
        %v1378 = vunpack.c.l.b16 %v1345
        %v1379 = vunpack.c.l.b16 %v1346
        %v1380 = vunpack.c.l.b16 %v1347
        %v1381 = vunpack.c.l.b16 %v1348
        %v1382 = vunpack.c.l.b16 %v1349
        %v1383 = vunpack.c.l.b16 %v1350
        %v1384 = vunpack.c.l.b16 %v1351
        %v1385 = vunpack.c.l.b16 %v1352
        %v1386 = vunpack.c.l.b16 %v1353
        %v1387 = vunpack.c.l.b16 %v1354
        %v1388 = vunpack.c.l.b16 %v1355
        %v1389 = vunpack.c.l.b16 %v1356
        %v1390 = vunpack.c.l.b16 %v1357
        %v1391 = vunpack.c.l.b16 %v1358
        %v1392 = vpack.c.b16 %v1377, %v1376
        %v1393 = vpack.c.b16 %v1379, %v1378
        %v1394 = vpack.c.b16 %v1381, %v1380
        %v1395 = vpack.c.b16 %v1383, %v1382
        %v1396 = vpack.c.b16 %v1385, %v1384
        %v1397 = vpack.c.b16 %v1387, %v1386
        %v1398 = vpack.c.b16 %v1389, %v1388
        %v1399 = vpack.c.b16 %v1391, %v1390
        %1408 = vmatpush.bf16.msra.mxu0 %v1399
        %1409 = vmatpush.bf16.msra.mxu0 %v1398
        %1410 = vmatpush.bf16.msra.mxu0 %v1397
        %1411 = vmatpush.bf16.msra.mxu0 %v1396
        %1412 = vmatpush.bf16.msra.mxu0 %v1395
        %1413 = vmatpush.bf16.msra.mxu0 %v1394
        %1414 = vmatpush.bf16.msra.mxu0 %v1393
        %1415 = vmatpush.bf16.msra.mxu0 %v1392
        %1416 = vmatmul.bf16.gmra.mxu0 %v1262
        %v1417 = vpop.f32.mrf.mxu0
        %v1418 = vadd.f32 %v1359, %v1417
        %v1419 = vpop.f32.mrf.mxu0
        %1420 = vdwg.mxu0
        %s1421 = scalar_lea.vmem [#allocation2], 384
        %v1422 = vld [vmem:[%s1421] sm:$0xf]
        %v1423 = vld [vmem:[%s1421 + $0x4] sm:$0xf]
        %v1424 = vld [vmem:[%s1421 + $0x8] sm:$0xf]
        %v1425 = vld [vmem:[%s1421 + $0xc] sm:$0xf]
        %v1426 = vld [vmem:[%s1421 + $0x10] sm:$0xf]
        %v1427 = vld [vmem:[%s1421 + $0x14] sm:$0xf]
        %v1428 = vld [vmem:[%s1421 + $0x18] sm:$0xf]
        %v1429 = vld [vmem:[%s1421 + $0x1c] sm:$0xf]
        %v1430 = vld [vmem:[%s1421 + $0x20] sm:$0xf]
        %v1431 = vld [vmem:[%s1421 + $0x24] sm:$0xf]
        %v1432 = vld [vmem:[%s1421 + $0x28] sm:$0xf]
        %v1433 = vld [vmem:[%s1421 + $0x2c] sm:$0xf]
        %v1434 = vld [vmem:[%s1421 + $0x30] sm:$0xf]
        %v1435 = vld [vmem:[%s1421 + $0x34] sm:$0xf]
        %v1436 = vld [vmem:[%s1421 + $0x38] sm:$0xf]
        %v1437 = vld [vmem:[%s1421 + $0x3c] sm:$0xf]
        %v1438 = vperm.slane %v228, 0
        %v1455 = vunpack.c.l.b16 %v1422
        %v1456 = vunpack.c.l.b16 %v1423
        %v1457 = vunpack.c.l.b16 %v1424
        %v1458 = vunpack.c.l.b16 %v1425
        %v1459 = vunpack.c.l.b16 %v1426
        %v1460 = vunpack.c.l.b16 %v1427
        %v1461 = vunpack.c.l.b16 %v1428
        %v1462 = vunpack.c.l.b16 %v1429
        %v1463 = vunpack.c.l.b16 %v1430
        %v1464 = vunpack.c.l.b16 %v1431
        %v1465 = vunpack.c.l.b16 %v1432
        %v1466 = vunpack.c.l.b16 %v1433
        %v1467 = vunpack.c.l.b16 %v1434
        %v1468 = vunpack.c.l.b16 %v1435
        %v1469 = vunpack.c.l.b16 %v1436
        %v1470 = vunpack.c.l.b16 %v1437
        %v1471 = vpack.c.b16 %v1456, %v1455
        %v1472 = vpack.c.b16 %v1458, %v1457
        %v1473 = vpack.c.b16 %v1460, %v1459
        %v1474 = vpack.c.b16 %v1462, %v1461
        %v1475 = vpack.c.b16 %v1464, %v1463
        %v1476 = vpack.c.b16 %v1466, %v1465
        %v1477 = vpack.c.b16 %v1468, %v1467
        %v1478 = vpack.c.b16 %v1470, %v1469
        %1487 = vmatpush.bf16.msra.mxu0 %v1478
        %1488 = vmatpush.bf16.msra.mxu0 %v1477
        %1489 = vmatpush.bf16.msra.mxu0 %v1476
        %1490 = vmatpush.bf16.msra.mxu0 %v1475
        %1491 = vmatpush.bf16.msra.mxu0 %v1474
        %1492 = vmatpush.bf16.msra.mxu0 %v1473
        %1493 = vmatpush.bf16.msra.mxu0 %v1472
        %1494 = vmatpush.bf16.msra.mxu0 %v1471
        %1495 = vmatmul.bf16.gmra.mxu0 %v1262
        %v1496 = vpop.f32.mrf.mxu0
        %v1497 = vadd.f32 %v1438, %v1496
        %v1498 = vpop.f32.mrf.mxu0
        %1499 = vdwg.mxu0
        %v1501 = vrot.slane %v1339, 1
        %v1502 = vrot.slane %v1339, 2
        %v1503 = vrot.slane %v1339, 3
        %v1504 = vrot.slane %v1339, 4
        %v1505 = vrot.slane %v1339, 5
        %v1506 = vrot.slane %v1339, 6
        %v1507 = vrot.slane %v1339, 7
        %v1509 = vrot.slane %v1418, 4
        %v1511 = vperm.slane %v1339, 0
        %v1512 = vperm.slane %v1501, 0
        %v1513 = vperm.slane %v1502, 0
        %v1514 = vperm.slane %v1503, 0
        %v1515 = vperm.slane %v1504, 0
        %v1516 = vperm.slane %v1505, 0
        %v1517 = vperm.slane %v1506, 0
        %v1518 = vperm.slane %v1507, 0
        %v1527 = vmul.f32 %v1511, %v1418
        %v1528 = vmul.f32 %v1512, %v1418
        %v1529 = vmul.f32 %v1513, %v1418
        %v1530 = vmul.f32 %v1514, %v1418
        %v1531 = vmul.f32 %v1515, %v1509
        %v1532 = vmul.f32 %v1516, %v1509
        %v1533 = vmul.f32 %v1517, %v1509
        %v1534 = vmul.f32 %v1518, %v1509
        %v1536 = vrot.slane %v1497, 4
        %1546 = vst [vmem:[#allocation1] ss:$2 sm:$0xff] %v1527
        %s1547 = scalar_lea.vmem [#allocation1], 1
        %1548 = vst [vmem:[%s1547] ss:$2 sm:$0xff] %v1528
        %s1549 = scalar_lea.vmem [#allocation1], 16
        %1550 = vst [vmem:[%s1549] ss:$2 sm:$0xff] %v1529
        %s1551 = scalar_lea.vmem [#allocation1], 17
        %1552 = vst [vmem:[%s1551] ss:$2 sm:$0xff] %v1530
        %s1553 = scalar_lea.vmem [#allocation1], 32
        %1554 = vst [vmem:[%s1553] ss:$2 sm:$0xff] %v1531
        %s1555 = scalar_lea.vmem [#allocation1], 33
        %1556 = vst [vmem:[%s1555] ss:$2 sm:$0xff] %v1532
        %s1557 = scalar_lea.vmem [#allocation1], 48
        %1558 = vst [vmem:[%s1557] ss:$2 sm:$0xff] %v1533
        %s1559 = scalar_lea.vmem [#allocation1], 49
        %1560 = vst [vmem:[%s1559] ss:$2 sm:$0xff] %v1534
        %v1561 = vld.sshfl [vmem:[#allocation1] sm:$0xff pattern:$0x75316420]
        %v1562 = vld.sshfl [vmem:[#allocation1 + $0x10] sm:$0xff pattern:$0x75316420]
        %v1563 = vld.sshfl [vmem:[#allocation1 + $0x20] sm:$0xff pattern:$0x75316420]
        %v1564 = vld.sshfl [vmem:[#allocation1 + $0x30] sm:$0xff pattern:$0x75316420]
        %1569 = vmatpush.msra.mxu0 %v244
        %1570 = vmatpush.msra.mxu0 %v243
        %1571 = vmatpush.msra.mxu0 %v242
        %1572 = vmatpush.msra.mxu0 %v241
        %1573 = vmatpush.msra.mxu0 %v240
        %1574 = vmatpush.msra.mxu0 %v239
        %1575 = vmatpush.msra.mxu0 %v238
        %1576 = vmatpush.msra.mxu0 %v237
        %1577 = vmatpush.msra.mxu0 %v236
        %1578 = vmatpush.msra.mxu0 %v235
        %1579 = vmatpush.msra.mxu0 %v234
        %1580 = vmatpush.msra.mxu0 %v233
        %1581 = vmatpush.msra.mxu0 %v232
        %1582 = vmatpush.msra.mxu0 %v231
        %1583 = vmatpush.msra.mxu0 %v230
        %1584 = vmatpush.msra.mxu0 %v229
        %1585 = vmatmul.f32.gmra.mxu0 %v1561
        %v1586 = vpop.f32.mrf.mxu0
        %v1587 = vadd.f32 0.0, %v1586
        %1588 = vmatmul.f32.gmra.mxu0 %v1562
        %v1589 = vpop.f32.mrf.mxu0
        %v1590 = vadd.f32 0.0, %v1589
        %1591 = vmatmul.f32.gmra.mxu0 %v1563
        %v1592 = vpop.f32.mrf.mxu0
        %v1593 = vadd.f32 0.0, %v1592
        %1594 = vmatmul.f32.gmra.mxu0 %v1564
        %v1595 = vpop.f32.mrf.mxu0
        %v1596 = vadd.f32 0.0, %v1595
        %1597 = vdwg.mxu0
        %v1602 = vrot.slane %v1587, 4
        %v1603 = vrot.slane %v1590, 4
        %v1604 = vrot.slane %v1593, 4
        %v1605 = vrot.slane %v1596, 4
        %v1610 = vmul.f32 %v1587, 0.17677669
        %v1611 = vmul.f32 %v1602, 0.17677669
        %v1612 = vmul.f32 %v1590, 0.17677669
        %v1613 = vmul.f32 %v1603, 0.17677669
        %v1614 = vmul.f32 %v1593, 0.17677669
        %v1615 = vmul.f32 %v1604, 0.17677669
        %v1616 = vmul.f32 %v1596, 0.17677669
        %v1617 = vmul.f32 %v1605, 0.17677669
        %vm1618 = vcmask 1043456
        %v1619 = vsel %vm1618, %v1610, -inf
        %v1620 = vrot.slane %v1619, 4
        %v1621 = vmax.f32 %v1619, %v1620
        %v1622 = vrot.slane %v1621, 2
        %v1623 = vmax.f32 %v1621, %v1622
        %v1624 = vrot.slane %v1623, 1
        %v1625 = vmax.f32 %v1623, %v1624
        %v1626 = vsel %vm1618, %v1611, -inf
        %v1627 = vrot.slane %v1626, 4
        %v1628 = vmax.f32 %v1626, %v1627
        %v1629 = vrot.slane %v1628, 2
        %v1630 = vmax.f32 %v1628, %v1629
        %v1631 = vrot.slane %v1630, 1
        %v1632 = vmax.f32 %v1630, %v1631
        %v1633 = vsel %vm1618, %v1612, -inf
        %v1634 = vrot.slane %v1633, 4
        %v1635 = vmax.f32 %v1633, %v1634
        %v1636 = vrot.slane %v1635, 2
        %v1637 = vmax.f32 %v1635, %v1636
        %v1638 = vrot.slane %v1637, 1
        %v1639 = vmax.f32 %v1637, %v1638
        %v1640 = vsel %vm1618, %v1613, -inf
        %v1641 = vrot.slane %v1640, 4
        %v1642 = vmax.f32 %v1640, %v1641
        %v1643 = vrot.slane %v1642, 2
        %v1644 = vmax.f32 %v1642, %v1643
        %v1645 = vrot.slane %v1644, 1
        %v1646 = vmax.f32 %v1644, %v1645
        %v1647 = vsel %vm1618, %v1614, -inf
        %v1648 = vrot.slane %v1647, 4
        %v1649 = vmax.f32 %v1647, %v1648
        %v1650 = vrot.slane %v1649, 2
        %v1651 = vmax.f32 %v1649, %v1650
        %v1652 = vrot.slane %v1651, 1
        %v1653 = vmax.f32 %v1651, %v1652
        %v1654 = vsel %vm1618, %v1615, -inf
        %v1655 = vrot.slane %v1654, 4
        %v1656 = vmax.f32 %v1654, %v1655
        %v1657 = vrot.slane %v1656, 2
        %v1658 = vmax.f32 %v1656, %v1657
        %v1659 = vrot.slane %v1658, 1
        %v1660 = vmax.f32 %v1658, %v1659
        %v1661 = vsel %vm1618, %v1616, -inf
        %v1662 = vrot.slane %v1661, 4
        %v1663 = vmax.f32 %v1661, %v1662
        %v1664 = vrot.slane %v1663, 2
        %v1665 = vmax.f32 %v1663, %v1664
        %v1666 = vrot.slane %v1665, 1
        %v1667 = vmax.f32 %v1665, %v1666
        %v1668 = vsel %vm1618, %v1617, -inf
        %v1669 = vrot.slane %v1668, 4
        %v1670 = vmax.f32 %v1668, %v1669
        %v1671 = vrot.slane %v1670, 2
        %v1672 = vmax.f32 %v1670, %v1671
        %v1673 = vrot.slane %v1672, 1
        %v1674 = vmax.f32 %v1672, %v1673
        %v1675 = vsub.f32 %v1610, %v1625
        %v1676 = vsub.f32 %v1611, %v1632
        %v1677 = vsub.f32 %v1612, %v1639
        %v1678 = vsub.f32 %v1613, %v1646
        %v1679 = vsub.f32 %v1614, %v1653
        %v1680 = vsub.f32 %v1615, %v1660
        %v1681 = vsub.f32 %v1616, %v1667
        %v1682 = vsub.f32 %v1617, %v1674
        %v1683 = vmul.f32 %v1675, 1.442695
        %v1684 = vpow.pop %v1683
        %v1685 = vmul.f32 %v1676, 1.442695
        %v1686 = vpow.pop %v1685
        %v1687 = vmul.f32 %v1677, 1.442695
        %v1688 = vpow.pop %v1687
        %v1689 = vmul.f32 %v1678, 1.442695
        %v1690 = vpow.pop %v1689
        %v1691 = vmul.f32 %v1679, 1.442695
        %v1692 = vpow.pop %v1691
        %v1693 = vmul.f32 %v1680, 1.442695
        %v1694 = vpow.pop %v1693
        %v1695 = vmul.f32 %v1681, 1.442695
        %v1696 = vpow.pop %v1695
        %v1697 = vmul.f32 %v1682, 1.442695
        %v1698 = vpow.pop %v1697
        %v1699 = vsel %vm1618, %v1684, 0.0
        %v1700 = vrot.slane %v1699, 4
        %v1701 = vadd.f32 %v1699, %v1700
        %v1702 = vrot.slane %v1701, 2
        %v1703 = vadd.f32 %v1701, %v1702
        %v1704 = vrot.slane %v1703, 1
        %v1705 = vadd.f32 %v1703, %v1704
        %v1706 = vsel %vm1618, %v1686, 0.0
        %v1707 = vrot.slane %v1706, 4
        %v1708 = vadd.f32 %v1706, %v1707
        %v1709 = vrot.slane %v1708, 2
        %v1710 = vadd.f32 %v1708, %v1709
        %v1711 = vrot.slane %v1710, 1
        %v1712 = vadd.f32 %v1710, %v1711
        %v1713 = vsel %vm1618, %v1688, 0.0
        %v1714 = vrot.slane %v1713, 4
        %v1715 = vadd.f32 %v1713, %v1714
        %v1716 = vrot.slane %v1715, 2
        %v1717 = vadd.f32 %v1715, %v1716
        %v1718 = vrot.slane %v1717, 1
        %v1719 = vadd.f32 %v1717, %v1718
        %v1720 = vsel %vm1618, %v1690, 0.0
        %v1721 = vrot.slane %v1720, 4
        %v1722 = vadd.f32 %v1720, %v1721
        %v1723 = vrot.slane %v1722, 2
        %v1724 = vadd.f32 %v1722, %v1723
        %v1725 = vrot.slane %v1724, 1
        %v1726 = vadd.f32 %v1724, %v1725
        %v1727 = vsel %vm1618, %v1692, 0.0
        %v1728 = vrot.slane %v1727, 4
        %v1729 = vadd.f32 %v1727, %v1728
        %v1730 = vrot.slane %v1729, 2
        %v1731 = vadd.f32 %v1729, %v1730
        %v1732 = vrot.slane %v1731, 1
        %v1733 = vadd.f32 %v1731, %v1732
        %v1734 = vsel %vm1618, %v1694, 0.0
        %v1735 = vrot.slane %v1734, 4
        %v1736 = vadd.f32 %v1734, %v1735
        %v1737 = vrot.slane %v1736, 2
        %v1738 = vadd.f32 %v1736, %v1737
        %v1739 = vrot.slane %v1738, 1
        %v1740 = vadd.f32 %v1738, %v1739
        %v1741 = vsel %vm1618, %v1696, 0.0
        %v1742 = vrot.slane %v1741, 4
        %v1743 = vadd.f32 %v1741, %v1742
        %v1744 = vrot.slane %v1743, 2
        %v1745 = vadd.f32 %v1743, %v1744
        %v1746 = vrot.slane %v1745, 1
        %v1747 = vadd.f32 %v1745, %v1746
        %v1748 = vsel %vm1618, %v1698, 0.0
        %v1749 = vrot.slane %v1748, 4
        %v1750 = vadd.f32 %v1748, %v1749
        %v1751 = vrot.slane %v1750, 2
        %v1752 = vadd.f32 %v1750, %v1751
        %v1753 = vrot.slane %v1752, 1
        %v1754 = vadd.f32 %v1752, %v1753
        %v1755 = vrcp.pop %v1705
        %v1756 = vmul.f32 %v1705, %v1755
        %v1757 = vsub.f32 1.0, %v1756
        %v1758 = vmul.f32 %v1755, %v1757
        %v1759 = vadd.f32 %v1755, %v1758
        %vm1760 = vweird.f32 %v1705
        %vm1761 = vweird.f32 %v1755
        %vm1762 = vmor %vm1760, %vm1761
        %v1763 = vsel %vm1762, %v1755, %v1759
        %v1764 = vand.u32 2147483647, %v1705
        %vm1765 = vcmp.eq.f32.partialorder %v1764, 8.507059e+37
        %v1766 = vand.u32 %v1705, 2147483648
        %v1767 = vor.u32 1.1754944e-38, %v1766
        %v1768 = vsel %vm1765, %v1767, %v1763
        %v1769 = vmul.f32 %v1684, %v1768
        %v1770 = vrcp.pop %v1712
        %v1771 = vmul.f32 %v1712, %v1770
        %v1772 = vsub.f32 1.0, %v1771
        %v1773 = vmul.f32 %v1770, %v1772
        %v1774 = vadd.f32 %v1770, %v1773
        %vm1775 = vweird.f32 %v1712
        %vm1776 = vweird.f32 %v1770
        %vm1777 = vmor %vm1775, %vm1776
        %v1778 = vsel %vm1777, %v1770, %v1774
        %v1779 = vand.u32 2147483647, %v1712
        %vm1780 = vcmp.eq.f32.partialorder %v1779, 8.507059e+37
        %v1781 = vand.u32 %v1712, 2147483648
        %v1782 = vor.u32 1.1754944e-38, %v1781
        %v1783 = vsel %vm1780, %v1782, %v1778
        %v1784 = vmul.f32 %v1686, %v1783
        %v1785 = vrcp.pop %v1719
        %v1786 = vmul.f32 %v1719, %v1785
        %v1787 = vsub.f32 1.0, %v1786
        %v1788 = vmul.f32 %v1785, %v1787
        %v1789 = vadd.f32 %v1785, %v1788
        %vm1790 = vweird.f32 %v1719
        %vm1791 = vweird.f32 %v1785
        %vm1792 = vmor %vm1790, %vm1791
        %v1793 = vsel %vm1792, %v1785, %v1789
        %v1794 = vand.u32 2147483647, %v1719
        %vm1795 = vcmp.eq.f32.partialorder %v1794, 8.507059e+37
        %v1796 = vand.u32 %v1719, 2147483648
        %v1797 = vor.u32 1.1754944e-38, %v1796
        %v1798 = vsel %vm1795, %v1797, %v1793
        %v1799 = vmul.f32 %v1688, %v1798
        %v1800 = vrcp.pop %v1726
        %v1801 = vmul.f32 %v1726, %v1800
        %v1802 = vsub.f32 1.0, %v1801
        %v1803 = vmul.f32 %v1800, %v1802
        %v1804 = vadd.f32 %v1800, %v1803
        %vm1805 = vweird.f32 %v1726
        %vm1806 = vweird.f32 %v1800
        %vm1807 = vmor %vm1805, %vm1806
        %v1808 = vsel %vm1807, %v1800, %v1804
        %v1809 = vand.u32 2147483647, %v1726
        %vm1810 = vcmp.eq.f32.partialorder %v1809, 8.507059e+37
        %v1811 = vand.u32 %v1726, 2147483648
        %v1812 = vor.u32 1.1754944e-38, %v1811
        %v1813 = vsel %vm1810, %v1812, %v1808
        %v1814 = vmul.f32 %v1690, %v1813
        %v1815 = vrcp.pop %v1733
        %v1816 = vmul.f32 %v1733, %v1815
        %v1817 = vsub.f32 1.0, %v1816
        %v1818 = vmul.f32 %v1815, %v1817
        %v1819 = vadd.f32 %v1815, %v1818
        %vm1820 = vweird.f32 %v1733
        %vm1821 = vweird.f32 %v1815
        %vm1822 = vmor %vm1820, %vm1821
        %v1823 = vsel %vm1822, %v1815, %v1819
        %v1824 = vand.u32 2147483647, %v1733
        %vm1825 = vcmp.eq.f32.partialorder %v1824, 8.507059e+37
        %v1826 = vand.u32 %v1733, 2147483648
        %v1827 = vor.u32 1.1754944e-38, %v1826
        %v1828 = vsel %vm1825, %v1827, %v1823
        %v1829 = vmul.f32 %v1692, %v1828
        %v1830 = vrcp.pop %v1740
        %v1831 = vmul.f32 %v1740, %v1830
        %v1832 = vsub.f32 1.0, %v1831
        %v1833 = vmul.f32 %v1830, %v1832
        %v1834 = vadd.f32 %v1830, %v1833
        %vm1835 = vweird.f32 %v1740
        %vm1836 = vweird.f32 %v1830
        %vm1837 = vmor %vm1835, %vm1836
        %v1838 = vsel %vm1837, %v1830, %v1834
        %v1839 = vand.u32 2147483647, %v1740
        %vm1840 = vcmp.eq.f32.partialorder %v1839, 8.507059e+37
        %v1841 = vand.u32 %v1740, 2147483648
        %v1842 = vor.u32 1.1754944e-38, %v1841
        %v1843 = vsel %vm1840, %v1842, %v1838
        %v1844 = vmul.f32 %v1694, %v1843
        %v1845 = vrcp.pop %v1747
        %v1846 = vmul.f32 %v1747, %v1845
        %v1847 = vsub.f32 1.0, %v1846
        %v1848 = vmul.f32 %v1845, %v1847
        %v1849 = vadd.f32 %v1845, %v1848
        %vm1850 = vweird.f32 %v1747
        %vm1851 = vweird.f32 %v1845
        %vm1852 = vmor %vm1850, %vm1851
        %v1853 = vsel %vm1852, %v1845, %v1849
        %v1854 = vand.u32 2147483647, %v1747
        %vm1855 = vcmp.eq.f32.partialorder %v1854, 8.507059e+37
        %v1856 = vand.u32 %v1747, 2147483648
        %v1857 = vor.u32 1.1754944e-38, %v1856
        %v1858 = vsel %vm1855, %v1857, %v1853
        %v1859 = vmul.f32 %v1696, %v1858
        %v1860 = vrcp.pop %v1754
        %v1861 = vmul.f32 %v1754, %v1860
        %v1862 = vsub.f32 1.0, %v1861
        %v1863 = vmul.f32 %v1860, %v1862
        %v1864 = vadd.f32 %v1860, %v1863
        %vm1865 = vweird.f32 %v1754
        %vm1866 = vweird.f32 %v1860
        %vm1867 = vmor %vm1865, %vm1866
        %v1868 = vsel %vm1867, %v1860, %v1864
        %v1869 = vand.u32 2147483647, %v1754
        %vm1870 = vcmp.eq.f32.partialorder %v1869, 8.507059e+37
        %v1871 = vand.u32 %v1754, 2147483648
        %v1872 = vor.u32 1.1754944e-38, %v1871
        %v1873 = vsel %vm1870, %v1872, %v1868
        %v1874 = vmul.f32 %v1698, %v1873
        %v1875 = vmul.f32 %v1769, %v1497
        %v1876 = vmul.f32 %v1784, %v1497
        %v1877 = vmul.f32 %v1799, %v1497
        %v1878 = vmul.f32 %v1814, %v1497
        %v1879 = vmul.f32 %v1829, %v1536
        %v1880 = vmul.f32 %v1844, %v1536
        %v1881 = vmul.f32 %v1859, %v1536
        %v1882 = vmul.f32 %v1874, %v1536
        %v1883 = vsel %vm1618, %v1875, 0.0
        %v1884 = vrot.slane %v1883, 4
        %v1885 = vadd.f32 %v1883, %v1884
        %v1886 = vrot.slane %v1885, 2
        %v1887 = vadd.f32 %v1885, %v1886
        %v1888 = vrot.slane %v1887, 1
        %v1889 = vadd.f32 %v1887, %v1888
        %v1890 = vsel %vm1618, %v1876, 0.0
        %v1891 = vrot.slane %v1890, 4
        %v1892 = vadd.f32 %v1890, %v1891
        %v1893 = vrot.slane %v1892, 2
        %v1894 = vadd.f32 %v1892, %v1893
        %v1895 = vrot.slane %v1894, 1
        %v1896 = vadd.f32 %v1894, %v1895
        %v1897 = vsel %vm1618, %v1877, 0.0
        %v1898 = vrot.slane %v1897, 4
        %v1899 = vadd.f32 %v1897, %v1898
        %v1900 = vrot.slane %v1899, 2
        %v1901 = vadd.f32 %v1899, %v1900
        %v1902 = vrot.slane %v1901, 1
        %v1903 = vadd.f32 %v1901, %v1902
        %v1904 = vsel %vm1618, %v1878, 0.0
        %v1905 = vrot.slane %v1904, 4
        %v1906 = vadd.f32 %v1904, %v1905
        %v1907 = vrot.slane %v1906, 2
        %v1908 = vadd.f32 %v1906, %v1907
        %v1909 = vrot.slane %v1908, 1
        %v1910 = vadd.f32 %v1908, %v1909
        %v1911 = vsel %vm1618, %v1879, 0.0
        %v1912 = vrot.slane %v1911, 4
        %v1913 = vadd.f32 %v1911, %v1912
        %v1914 = vrot.slane %v1913, 2
        %v1915 = vadd.f32 %v1913, %v1914
        %v1916 = vrot.slane %v1915, 1
        %v1917 = vadd.f32 %v1915, %v1916
        %v1918 = vsel %vm1618, %v1880, 0.0
        %v1919 = vrot.slane %v1918, 4
        %v1920 = vadd.f32 %v1918, %v1919
        %v1921 = vrot.slane %v1920, 2
        %v1922 = vadd.f32 %v1920, %v1921
        %v1923 = vrot.slane %v1922, 1
        %v1924 = vadd.f32 %v1922, %v1923
        %v1925 = vsel %vm1618, %v1881, 0.0
        %v1926 = vrot.slane %v1925, 4
        %v1927 = vadd.f32 %v1925, %v1926
        %v1928 = vrot.slane %v1927, 2
        %v1929 = vadd.f32 %v1927, %v1928
        %v1930 = vrot.slane %v1929, 1
        %v1931 = vadd.f32 %v1929, %v1930
        %v1932 = vsel %vm1618, %v1882, 0.0
        %v1933 = vrot.slane %v1932, 4
        %v1934 = vadd.f32 %v1932, %v1933
        %v1935 = vrot.slane %v1934, 2
        %v1936 = vadd.f32 %v1934, %v1935
        %v1937 = vrot.slane %v1936, 1
        %v1938 = vadd.f32 %v1936, %v1937
        %v1939 = vpack.c.bf16 %v1889, %v1889
        %v1940 = vpack.c.bf16 %v1896, %v1896
        %v1941 = vpack.c.bf16 %v1903, %v1903
        %v1942 = vpack.c.bf16 %v1910, %v1910
        %v1943 = vpack.c.bf16 %v1917, %v1917
        %v1944 = vpack.c.bf16 %v1924, %v1924
        %v1945 = vpack.c.bf16 %v1931, %v1931
        %v1946 = vpack.c.bf16 %v1938, %v1938
        %s1947 = scalar_lea.vmem [#allocation2], 448
        %v1948 = vld [vmem:[%s1947] sm:$0xf]
        %v1949 = vld [vmem:[%s1947 + $0x4] sm:$0xf]
        %v1950 = vld [vmem:[%s1947 + $0x8] sm:$0xf]
        %v1951 = vld [vmem:[%s1947 + $0xc] sm:$0xf]
        %v1952 = vld [vmem:[%s1947 + $0x10] sm:$0xf]
        %v1953 = vld [vmem:[%s1947 + $0x14] sm:$0xf]
        %v1954 = vld [vmem:[%s1947 + $0x18] sm:$0xf]
        %v1955 = vld [vmem:[%s1947 + $0x1c] sm:$0xf]
        %v1956 = vld [vmem:[%s1947 + $0x20] sm:$0xf]
        %v1957 = vld [vmem:[%s1947 + $0x24] sm:$0xf]
        %v1958 = vld [vmem:[%s1947 + $0x28] sm:$0xf]
        %v1959 = vld [vmem:[%s1947 + $0x2c] sm:$0xf]
        %v1960 = vld [vmem:[%s1947 + $0x30] sm:$0xf]
        %v1961 = vld [vmem:[%s1947 + $0x34] sm:$0xf]
        %v1962 = vld [vmem:[%s1947 + $0x38] sm:$0xf]
        %v1963 = vld [vmem:[%s1947 + $0x3c] sm:$0xf]
        %v1964 = vperm.slane %v228, 1
        %v1973 = vunpack.c.l.b16 %v1939
        %v1974 = vunpack.c.l.b16 %v1940
        %v1975 = vunpack.c.l.b16 %v1941
        %v1976 = vunpack.c.l.b16 %v1942
        %v1977 = vunpack.c.l.b16 %v1943
        %v1978 = vunpack.c.l.b16 %v1944
        %v1979 = vunpack.c.l.b16 %v1945
        %v1980 = vunpack.c.l.b16 %v1946
        %v1981 = vsel %vm667, %v1974, %v1973
        %v1982 = vsel %vm670, %v1975, %v1981
        %v1983 = vsel %vm673, %v1976, %v1982
        %v1984 = vsel %vm675, %v1977, %v1983
        %v1985 = vsel %vm678, %v1978, %v1984
        %v1986 = vsel %vm681, %v1979, %v1985
        %v1987 = vsel %vm684, %v1980, %v1986
        %v1988 = vpack.c.b16 %v1987, %v1987
        %v2006 = vunpack.c.l.b16 %v1948
        %v2007 = vunpack.c.l.b16 %v1949
        %v2008 = vunpack.c.l.b16 %v1950
        %v2009 = vunpack.c.l.b16 %v1951
        %v2010 = vunpack.c.l.b16 %v1952
        %v2011 = vunpack.c.l.b16 %v1953
        %v2012 = vunpack.c.l.b16 %v1954
        %v2013 = vunpack.c.l.b16 %v1955
        %v2014 = vunpack.c.l.b16 %v1956
        %v2015 = vunpack.c.l.b16 %v1957
        %v2016 = vunpack.c.l.b16 %v1958
        %v2017 = vunpack.c.l.b16 %v1959
        %v2018 = vunpack.c.l.b16 %v1960
        %v2019 = vunpack.c.l.b16 %v1961
        %v2020 = vunpack.c.l.b16 %v1962
        %v2021 = vunpack.c.l.b16 %v1963
        %v2022 = vpack.c.b16 %v2007, %v2006
        %v2023 = vpack.c.b16 %v2009, %v2008
        %v2024 = vpack.c.b16 %v2011, %v2010
        %v2025 = vpack.c.b16 %v2013, %v2012
        %v2026 = vpack.c.b16 %v2015, %v2014
        %v2027 = vpack.c.b16 %v2017, %v2016
        %v2028 = vpack.c.b16 %v2019, %v2018
        %v2029 = vpack.c.b16 %v2021, %v2020
        %2038 = vmatpush.bf16.msra.mxu0 %v2029
        %2039 = vmatpush.bf16.msra.mxu0 %v2028
        %2040 = vmatpush.bf16.msra.mxu0 %v2027
        %2041 = vmatpush.bf16.msra.mxu0 %v2026
        %2042 = vmatpush.bf16.msra.mxu0 %v2025
        %2043 = vmatpush.bf16.msra.mxu0 %v2024
        %2044 = vmatpush.bf16.msra.mxu0 %v2023
        %2045 = vmatpush.bf16.msra.mxu0 %v2022
        %2046 = vmatmul.bf16.gmra.mxu0 %v1988
        %v2047 = vpop.f32.mrf.mxu0
        %v2048 = vadd.f32 %v1964, %v2047
        %v2049 = vpop.f32.mrf.mxu0
        %2050 = vdwg.mxu0
        %v2051 = vadd.f32 %v2048, %v1261
        %2052 = vadd.xlane.f32.xlu0 %v2051
        %v2053 = vpop.xlane.xlu0 %2052
        %v2054 = vmul.f32 %v2053, %v267
        %v2055 = vsub.f32 %v2051, %v2054
        %v2056 = vmul.f32 %v2055, %v2055
        %2057 = vadd.xlane.f32.xlu0 %v2056
        %v2058 = vpop.xlane.xlu0 %2057
        %v2059 = vmul.f32 %v2058, %v267
        %v2060 = vadd.f32 %v2059, 1e-05
        %v2061 = vrsqrt.pop %v2060
        %v2062 = vmul.f32 %v2061, %v2060
        %v2063 = vmul.f32 %v2062, %v2061
        %v2064 = vmul.f32 0.5, %v2063
        %v2065 = vsub.f32 1.5, %v2064
        %v2066 = vmul.f32 %v2061, %v2065
        %vm2067 = vweird.f32 %v2060
        %vm2068 = vweird.f32 %v2061
        %vm2069 = vmor %vm2067, %vm2068
        %v2070 = vsel %vm2069, %v2061, %v2066
        %v2071 = vmul.f32 %v2055, %v2070
        %v2072 = vperm.slane %v228, 2
        %v2073 = vmul.f32 %v2071, %v2072
        %v2074 = vperm.slane %v228, 3
        %v2075 = vadd.f32 %v2073, %v2074
        %v2076 = vpack.c.bf16 %v2075, %v2075
        %s2077 = scalar_lea.vmem [#allocation2], 512
        %v2078 = vld [vmem:[%s2077] sm:$0xf]
        %v2079 = vld [vmem:[%s2077 + $0x4] sm:$0xf]
        %v2080 = vld [vmem:[%s2077 + $0x8] sm:$0xf]
        %v2081 = vld [vmem:[%s2077 + $0xc] sm:$0xf]
        %v2082 = vld [vmem:[%s2077 + $0x10] sm:$0xf]
        %v2083 = vld [vmem:[%s2077 + $0x14] sm:$0xf]
        %v2084 = vld [vmem:[%s2077 + $0x18] sm:$0xf]
        %v2085 = vld [vmem:[%s2077 + $0x1c] sm:$0xf]
        %v2086 = vld [vmem:[%s2077 + $0x20] sm:$0xf]
        %v2087 = vld [vmem:[%s2077 + $0x24] sm:$0xf]
        %v2088 = vld [vmem:[%s2077 + $0x28] sm:$0xf]
        %v2089 = vld [vmem:[%s2077 + $0x2c] sm:$0xf]
        %v2090 = vld [vmem:[%s2077 + $0x30] sm:$0xf]
        %v2091 = vld [vmem:[%s2077 + $0x34] sm:$0xf]
        %v2092 = vld [vmem:[%s2077 + $0x38] sm:$0xf]
        %v2093 = vld [vmem:[%s2077 + $0x3c] sm:$0xf]
        %v2094 = vperm.slane %v228, 4
        %v2111 = vunpack.c.l.b16 %v2078
        %v2112 = vunpack.c.l.b16 %v2079
        %v2113 = vunpack.c.l.b16 %v2080
        %v2114 = vunpack.c.l.b16 %v2081
        %v2115 = vunpack.c.l.b16 %v2082
        %v2116 = vunpack.c.l.b16 %v2083
        %v2117 = vunpack.c.l.b16 %v2084
        %v2118 = vunpack.c.l.b16 %v2085
        %v2119 = vunpack.c.l.b16 %v2086
        %v2120 = vunpack.c.l.b16 %v2087
        %v2121 = vunpack.c.l.b16 %v2088
        %v2122 = vunpack.c.l.b16 %v2089
        %v2123 = vunpack.c.l.b16 %v2090
        %v2124 = vunpack.c.l.b16 %v2091
        %v2125 = vunpack.c.l.b16 %v2092
        %v2126 = vunpack.c.l.b16 %v2093
        %v2127 = vpack.c.b16 %v2112, %v2111
        %v2128 = vpack.c.b16 %v2114, %v2113
        %v2129 = vpack.c.b16 %v2116, %v2115
        %v2130 = vpack.c.b16 %v2118, %v2117
        %v2131 = vpack.c.b16 %v2120, %v2119
        %v2132 = vpack.c.b16 %v2122, %v2121
        %v2133 = vpack.c.b16 %v2124, %v2123
        %v2134 = vpack.c.b16 %v2126, %v2125
        %2143 = vmatpush.bf16.msra.mxu0 %v2134
        %2144 = vmatpush.bf16.msra.mxu0 %v2133
        %2145 = vmatpush.bf16.msra.mxu0 %v2132
        %2146 = vmatpush.bf16.msra.mxu0 %v2131
        %2147 = vmatpush.bf16.msra.mxu0 %v2130
        %2148 = vmatpush.bf16.msra.mxu0 %v2129
        %2149 = vmatpush.bf16.msra.mxu0 %v2128
        %2150 = vmatpush.bf16.msra.mxu0 %v2127
        %2151 = vmatmul.bf16.gmra.mxu0 %v2076
        %v2152 = vpop.f32.mrf.mxu0
        %v2153 = vadd.f32 %v2094, %v2152
        %v2154 = vpop.f32.mrf.mxu0
        %2155 = vdwg.mxu0
        %v2156 = vmul.f32 %v2153, 0.5
        %v2157 = vmul.f32 %v2153, 0.044715
        %v2158 = vmul.f32 %v2157, %v2153
        %v2159 = vmul.f32 %v2158, %v2153
        %v2160 = vadd.f32 %v2153, %v2159
        %v2161 = vmul.f32 %v2160, 0.7978846
        %v2162 = vtanh.pop %v2161
        %v2163 = vadd.f32 %v2162, 1.0
        %v2164 = vmul.f32 %v2156, %v2163
        %v2165 = vpack.c.bf16 %v2164, %v2164
        %s2166 = scalar_lea.vmem [#allocation2], 576
        %v2167 = vld [vmem:[%s2166] sm:$0xf]
        %v2168 = vld [vmem:[%s2166 + $0x4] sm:$0xf]
        %v2169 = vld [vmem:[%s2166 + $0x8] sm:$0xf]
        %v2170 = vld [vmem:[%s2166 + $0xc] sm:$0xf]
        %v2171 = vld [vmem:[%s2166 + $0x10] sm:$0xf]
        %v2172 = vld [vmem:[%s2166 + $0x14] sm:$0xf]
        %v2173 = vld [vmem:[%s2166 + $0x18] sm:$0xf]
        %v2174 = vld [vmem:[%s2166 + $0x1c] sm:$0xf]
        %v2175 = vld [vmem:[%s2166 + $0x20] sm:$0xf]
        %v2176 = vld [vmem:[%s2166 + $0x24] sm:$0xf]
        %v2177 = vld [vmem:[%s2166 + $0x28] sm:$0xf]
        %v2178 = vld [vmem:[%s2166 + $0x2c] sm:$0xf]
        %v2179 = vld [vmem:[%s2166 + $0x30] sm:$0xf]
        %v2180 = vld [vmem:[%s2166 + $0x34] sm:$0xf]
        %v2181 = vld [vmem:[%s2166 + $0x38] sm:$0xf]
        %v2182 = vld [vmem:[%s2166 + $0x3c] sm:$0xf]
        %v2183 = vperm.slane %v228, 5
        %v2200 = vunpack.c.l.b16 %v2167
        %v2201 = vunpack.c.l.b16 %v2168
        %v2202 = vunpack.c.l.b16 %v2169
        %v2203 = vunpack.c.l.b16 %v2170
        %v2204 = vunpack.c.l.b16 %v2171
        %v2205 = vunpack.c.l.b16 %v2172
        %v2206 = vunpack.c.l.b16 %v2173
        %v2207 = vunpack.c.l.b16 %v2174
        %v2208 = vunpack.c.l.b16 %v2175
        %v2209 = vunpack.c.l.b16 %v2176
        %v2210 = vunpack.c.l.b16 %v2177
        %v2211 = vunpack.c.l.b16 %v2178
        %v2212 = vunpack.c.l.b16 %v2179
        %v2213 = vunpack.c.l.b16 %v2180
        %v2214 = vunpack.c.l.b16 %v2181
        %v2215 = vunpack.c.l.b16 %v2182
        %v2216 = vpack.c.b16 %v2201, %v2200
        %v2217 = vpack.c.b16 %v2203, %v2202
        %v2218 = vpack.c.b16 %v2205, %v2204
        %v2219 = vpack.c.b16 %v2207, %v2206
        %v2220 = vpack.c.b16 %v2209, %v2208
        %v2221 = vpack.c.b16 %v2211, %v2210
        %v2222 = vpack.c.b16 %v2213, %v2212
        %v2223 = vpack.c.b16 %v2215, %v2214
        %2232 = vmatpush.bf16.msra.mxu0 %v2223
        %2233 = vmatpush.bf16.msra.mxu0 %v2222
        %2234 = vmatpush.bf16.msra.mxu0 %v2221
        %2235 = vmatpush.bf16.msra.mxu0 %v2220
        %2236 = vmatpush.bf16.msra.mxu0 %v2219
        %2237 = vmatpush.bf16.msra.mxu0 %v2218
        %2238 = vmatpush.bf16.msra.mxu0 %v2217
        %2239 = vmatpush.bf16.msra.mxu0 %v2216
        %2240 = vmatmul.bf16.gmra.mxu0 %v2165
        %v2241 = vpop.f32.mrf.mxu0
        %v2242 = vadd.f32 %v2183, %v2241
        %v2243 = vpop.f32.mrf.mxu0
        %2244 = vdwg.mxu0
        %v2245 = vadd.f32 %v2242, %v2051
        %2246 = vadd.xlane.f32.xlu0 %v2245
        %v2247 = vpop.xlane.xlu0 %2246
        %v2248 = vmul.f32 %v2247, %v267
        %v2249 = vsub.f32 %v2245, %v2248
        %v2250 = vmul.f32 %v2249, %v2249
        %2251 = vadd.xlane.f32.xlu0 %v2250
        %v2252 = vpop.xlane.xlu0 %2251
        %v2253 = vmul.f32 %v2252, %v267
        %v2254 = vadd.f32 %v2253, 1e-05
        %v2255 = vrsqrt.pop %v2254
        %v2256 = vmul.f32 %v2255, %v2254
        %v2257 = vmul.f32 %v2256, %v2255
        %v2258 = vmul.f32 0.5, %v2257
        %v2259 = vsub.f32 1.5, %v2258
        %v2260 = vmul.f32 %v2255, %v2259
        %vm2261 = vweird.f32 %v2254
        %vm2262 = vweird.f32 %v2255
        %vm2263 = vmor %vm2261, %vm2262
        %v2264 = vsel %vm2263, %v2255, %v2260
        %v2265 = vmul.f32 %v2249, %v2264
        %v2266 = vperm.slane %v228, 6
        %v2267 = vmul.f32 %v2265, %v2266
        %v2268 = vperm.slane %v228, 7
        %v2269 = vadd.f32 %v2267, %v2268
        %v2271 = vrot.slane %v2269, 4
        %2273 = vst [vmem:[%s210] sm:$0xf] %v2269
        %2274 = vst [vmem:[%s210 + $0x4] sm:$0xf] %v2271
        %s2275 = sand.u32 %s116, 1
        %s2276 = scalar_lea.sflag [#allocation4], %s2275
        %s2277 = sand.u32 %s116, 1
        %s2278 = smul.addr %s2277, 8
        %s2279 = scalar_lea.vmem [#allocation5], %s2278
        // Predicated region
        $region41: #{transformer_forward.1} parent=35 // pred_check
          %p2280 = pneg %p126
        $region42: #{transformer_forward.1} parent=35 // pred_check_branch
          %2282 = sbr.rel (%p2280) target = $region44
        $region43: #{transformer_forward.1} parent=35 // pred_region
          %s2283 = smul.u32 2, %s19
          %2285 = vsyncadd %s2276, 0
          %s2286 = smul.addr %s2283, 4
          %s2287 = scalar_lea.hbm %s4, %s2286
          %s2288 = sshll.u32 %s2279, 4
          %s2289 = int_to_ptr.vmem [resolvable:$true] %s2288
          %s2290 = sshll.u32 %s2287, 4
          %s2291 = int_to_ptr.hbm [resolvable:$true] %s2290
          %2296 = dma.vmem_to_hbm [thread:$0]  %s2289, 128, %s2291, %s2276, 64, 64, 4
        $region44: #{transformer_forward.1} parent=35 // pred_fallthru
          _
      $region36: #{transformer_forward.1} parent=5 // pred_fallthru
        _
      %p2297 = scmp.le.s32.totalorder 2, %s14
      // Predicated region
      $region45: #{transformer_forward.1} parent=5 // pred_check
        %p2298 = pneg %p2297
      $region46: #{transformer_forward.1} parent=5 // pred_check_branch
        %2300 = sbr.rel (%p2298) target = $region48
      $region47: #{transformer_forward.1} parent=5 // pred_region
        %s2301 = ssub.s32 %s14, 2
        // Predicated region
        $region49: #{transformer_forward.1} parent=47 // pred_check
          %p2302 = pneg %p132
        $region50: #{transformer_forward.1} parent=47 // pred_check_branch
          %2304 = sbr.rel (%p2302) target = $region52
        $region51: #{transformer_forward.1} parent=47 // pred_region
          %s2305 = sand.u32 %s117, 1
          %s2306 = scalar_lea.sflag [#allocation4], %s2305
          %s2307 = sand.u32 %s117, 1
          %s2308 = smul.addr %s2307, 8
          %s2309 = scalar_lea.vmem [#allocation5], %s2308
          %2311 = dma.done %s2306, 128
        $region52: #{transformer_forward.1} parent=47 // pred_fallthru
          _
      $region48: #{transformer_forward.1} parent=5 // pred_fallthru
        _
    $region6: #{transformer_forward.1} parent=1 // loop_footer
      %s18 = sadd.s32 1, %s14
    $region7: #{transformer_forward.1} parent=1 // loop_footer_branch
      %13 = sbr.rel target = $region3
    $region8: #{transformer_forward.1} parent=1 // loop_exit
      _
    %2312 = vsyncpa [#allocation3], 1
    %s2313 = scalar_lea.sflag [#allocation3], 1
    %2314 = vsyncpa %s2313, 1
    %2315 = vsyncpa [#allocation4], 1
    %s2316 = scalar_lea.sflag [#allocation4], 1
    %2317 = vsyncpa %s2316, 1

</llo_original>
